<compile_context>
chip_gen: v6e
topology: v6e:2x2x1
jax: 0.10.0
libtpu: 0.0.40
codegen_flags: <defaults>
</compile_context>

<pallas_src>
import functools
import math

import jax
import jax.numpy as jnp
from jax.experimental import pallas as pl
from jax.experimental.pallas import tpu as pltpu

EPS = 1e-5  # torch.nn.LayerNorm default eps


# ---------------------------------------------------------------------------
# Kernel 1: reducer -- Conv2d(k=r, stride=r) + LayerNorm2d + fused K/V projection.
# Single small block; all tensors are feature-major (C, tokens).
# ---------------------------------------------------------------------------
def reducer_kv_kernel(xp_ref, pp_ref, wpatch_ref, rb_ref, g_ref, b_ref,
                      wkv_ref, bkv_ref, kv_ref):
    f32, bf16 = jnp.float32, jnp.bfloat16
    # patches: (r*r*C, Nr); row (ky*r+kx)*C + cin, column m = hr*Wr + wr
    patches = (xp_ref[...] + pp_ref[...]).astype(bf16)
    # strided conv == ONE deep matmul: (C, r*r*C) @ (r*r*C, Nr)
    conv = jnp.dot(wpatch_ref[...], patches,
                   preferred_element_type=f32) + rb_ref[...]             # (C, Nr)
    # LayerNorm2d: normalize over channels (sublane axis), stats + affine in f32
    mu = jnp.mean(conv, axis=0, keepdims=True)
    xc = conv - mu
    var = jnp.mean(xc * xc, axis=0, keepdims=True)
    red = (xc * jax.lax.rsqrt(var + EPS) * g_ref[...] + b_ref[...]).astype(bf16)
    # fused K/V projection: (2C, C) @ (C, Nr)  -> [K ; V] feature-major
    kv = jnp.dot(wkv_ref[...], red, preferred_element_type=f32) + bkv_ref[...]
    kv_ref[...] = kv                                                     # (2C, Nr) f32


# ---------------------------------------------------------------------------
# Kernel 2: multi-head attention over one query tile (grid axis = query tiles).
# K/V block is resident; output stored natively lane-dense as (C, TQ).
# ---------------------------------------------------------------------------
def attention_kernel(x_ref, pos_ref, kv_ref, wq_ref, bq_ref, wo_ref, bo_ref,
                     o_ref, *, num_heads):
    f32, bf16 = jnp.float32, jnp.bfloat16
    C, TQ = x_ref.shape
    Nr = kv_ref.shape[1]
    d = C // num_heads
    scale = 1.0 / math.sqrt(d)

    # query tokens of this tile, feature-major (C, TQ): x + pos
    xp = (x_ref[...] + pos_ref[...]).astype(bf16)

    # Q projection: single lane-dense 2-D matmul, weights on the left
    # (no activation transpose), f32 accumulate + bias, then 1/sqrt(d) scale.
    q = jnp.dot(wq_ref[...], xp, preferred_element_type=f32) + bq_ref[...]   # (C, TQ)
    q = q * scale

    kv = kv_ref[...]                        # (2C, Nr) f32, resident across the grid
    k = kv[:C]                              # (C, Nr)
    v = kv[C:]                              # (C, Nr)

    # split heads on the (sublane) channel axis -- tile-aligned reshapes; the only
    # transpose is the tiny per-head (d, TQ) -> (TQ, d) swap of the projected Q.
    qh = jnp.swapaxes(q.reshape(num_heads, d, TQ), 1, 2).astype(bf16)    # (h, TQ, d)
    kh = k.reshape(num_heads, d, Nr).astype(bf16)                        # (h, d, Nr)
    vh = v.reshape(num_heads, d, Nr).astype(bf16)                        # (h, d, Nr)

    # scores + softmax over the (lane) key axis, all in f32
    s = jnp.einsum('hnd,hdm->hnm', qh, kh, preferred_element_type=f32)   # (h, TQ, Nr)
    s = s - jnp.max(s, axis=-1, keepdims=True)
    p = jnp.exp(s)
    p = p / jnp.sum(p, axis=-1, keepdims=True)      # exact divide (torch parity)

    # P @ V contracting the key axis of BOTH operands -> feature-major (h, d, TQ),
    # so the head-concat back to (C, TQ) is a free leading-dim merge.
    oh = jnp.einsum('hdm,hnm->hdn', vh, p.astype(bf16),
                    preferred_element_type=f32)                          # (h, d, TQ)
    oh = oh.reshape(C, TQ).astype(bf16)

    # out projection: one (C, C) @ (C, TQ) matmul; store natively as (C, TQ).
    out = jnp.dot(wo_ref[...], oh, preferred_element_type=f32) + bo_ref[...]
    o_ref[...] = out
    # TODO(synk): emit bf16 here (halve write-back BW) if the consumer tolerates it.


# ---------------------------------------------------------------------------
# Parameters (torch-convention shapes) and one-time preprocessing
# ---------------------------------------------------------------------------
def init_params(key, dim, reduction_ratio, img_size):
    C, r, S = dim, reduction_ratio, img_size
    ks = jax.random.split(key, 9)

    def nrm(k, shape, scale=0.02):
        return scale * jax.random.normal(k, shape, jnp.float32)

    p = {}
    p['pos'] = nrm(ks[0], (C, S, S))                 # pos_embedding = randn * 0.02
    p['red_w'] = nrm(ks[1], (C, C, r, r), 0.1)       # Conv2d(C, C, k=r, s=r).weight
    p['red_b'] = nrm(ks[2], (C,))
    p['lnr_g'] = 1.0 + nrm(ks[3], (C,))              # reducer LayerNorm2d affine
    p['lnr_b'] = nrm(ks[4], (C,))
    p['in_w'] = nrm(ks[5], (3 * C, C), 0.1)          # MHA in_proj_weight
    p['in_b'] = nrm(ks[6], (3 * C,))
    p['out_w'] = nrm(ks[7], (C, C), 0.1)             # MHA out_proj.weight
    p['out_b'] = nrm(ks[8], (C,))
    return p


def preprocess_params(params, H, W, r, num_heads):
    """One-time weight re-layout (hoisted out of the forward path)."""
    del num_heads  # heads are split inside the kernel via tile-aligned reshapes
    C = params['red_b'].shape[0]
    N = H * W
    Hr, Wr = H // r, W // r
    Nr = Hr * Wr
    f32, bf16 = jnp.float32, jnp.bfloat16

    pre = {}
    # positional embedding: feature-major (C, N) for the query path and per-tap
    # patch layout (r*r*C, Nr) for the reducer path.
    pre['pos_cn'] = params['pos'].reshape(C, N).astype(f32)
    pos5 = params['pos'].reshape(C, Hr, r, Wr, r)            # (c, hr, ky, wr, kx)
    pre['pos_patch'] = jnp.transpose(pos5, (2, 4, 0, 1, 3)).reshape(r * r * C, Nr).astype(f32)

    # conv weight as one deep-matmul operand: rows c_out, cols (ky, kx, c_in)
    pre['w_patch'] = jnp.transpose(params['red_w'], (0, 2, 3, 1)).reshape(C, r * r * C).astype(bf16)
    pre['red_b'] = params['red_b'].reshape(C, 1).astype(f32)
    pre['ln_g'] = params['lnr_g'].reshape(C, 1).astype(f32)
    pre['ln_b'] = params['lnr_b'].reshape(C, 1).astype(f32)

    # MHA projections kept as lane-dense 2-D matrices (torch in_proj order: q, k, v)
    in_w, in_b = params['in_w'], params['in_b']
    pre['wq'] = in_w[:C].astype(bf16)                        # (C, C)
    pre['bq'] = in_b[:C].reshape(C, 1).astype(f32)
    pre['wkv'] = in_w[C:].astype(bf16)                       # (2C, C) = [Wk ; Wv]
    pre['bkv'] = in_b[C:].reshape(2 * C, 1).astype(f32)
    pre['wo'] = params['out_w'].astype(bf16)                 # (C, C)
    pre['bo'] = params['out_b'].reshape(C, 1).astype(f32)
    return pre


# ---------------------------------------------------------------------------
# Forward wrapper (layout plumbing only: free reshapes + the per-tap patch view)
# ---------------------------------------------------------------------------
def _vmem():
    return pl.BlockSpec(memory_space=pltpu.MemorySpace.VMEM)


@functools.partial(jax.jit, static_argnames=('num_heads', 'reduction_ratio'))
def efficient_mha(x_chw, pre, *, num_heads, reduction_ratio):
    C, H, W = x_chw.shape
    r = reduction_ratio
    N = H * W
    Hr, Wr = H // r, W // r
    Nr = Hr * Wr

    # layout plumbing (no arithmetic): per-tap patch view of x for the reducer,
    # and the free (C, N) flattening for the query path.
    x_patch = jnp.transpose(x_chw.reshape(C, Hr, r, Wr, r),
                            (2, 4, 0, 1, 3)).reshape(r * r * C, Nr)
    x_cn = x_chw.reshape(C, N)

    # ---- kernel 1: reducer conv + LayerNorm2d + fused K/V projection (tiny block)
    kv = pl.pallas_call(
        reducer_kv_kernel,
        out_shape=jax.ShapeDtypeStruct((2 * C, Nr), jnp.float32),
        in_specs=[_vmem() for _ in range(8)],
        out_specs=_vmem(),
    )(x_patch, pre['pos_patch'], pre['w_patch'], pre['red_b'],
      pre['ln_g'], pre['ln_b'], pre['wkv'], pre['bkv'])

    # ---- kernel 2: attention tiled over the query axis ("parallel" grid)
    TQ = 128 if N % 128 == 0 else N
    assert N % TQ == 0, "query-tile size must divide N"
    kernel = functools.partial(attention_kernel, num_heads=num_heads)
    out_cn = pl.pallas_call(
        kernel,
        out_shape=jax.ShapeDtypeStruct((C, N), jnp.float32),
        grid=(N // TQ,),
        in_specs=[
            pl.BlockSpec((C, TQ), lambda i: (0, i)),        # x tile
            pl.BlockSpec((C, TQ), lambda i: (0, i)),        # pos tile
            pl.BlockSpec((2 * C, Nr), lambda i: (0, 0)),    # K/V block, resident
            pl.BlockSpec((C, C), lambda i: (0, 0)),         # Wq, resident
            pl.BlockSpec((C, 1), lambda i: (0, 0)),         # bq
            pl.BlockSpec((C, C), lambda i: (0, 0)),         # Wo, resident
            pl.BlockSpec((C, 1), lambda i: (0, 0)),         # bo
        ],
        out_specs=pl.BlockSpec((C, TQ), lambda i: (0, i)),
        compiler_params=pltpu.CompilerParams(
            dimension_semantics=("parallel",),
            # generous for this size on every chip; re-derive at real sizes
            # (128 MiB physical on v5e/v6e, 64 MiB on v7x).
            vmem_limit_bytes=32 * 1024 * 1024),
    )(x_cn, pre['pos_cn'], kv, pre['wq'], pre['bq'], pre['wo'], pre['bo'])

    return out_cn.reshape(C, H, W)


# ---------------------------------------------------------------------------
if __name__ == "__main__":
    embed_dim, num_heads, reduction_ratio, img_size = 32, 4, 2, 16

    key = jax.random.PRNGKey(0)
    k_x, k_p = jax.random.split(key)
    x = jax.random.normal(k_x, (embed_dim, img_size, img_size), jnp.float32)  # (C, H, W)
    params = init_params(k_p, embed_dim, reduction_ratio, img_size)
    pre = preprocess_params(params, img_size, img_size, reduction_ratio, num_heads)

    out = efficient_mha(x, pre, num_heads=num_heads, reduction_ratio=reduction_ratio)
    out = jax.block_until_ready(out)
    assert out.shape == x.shape and out.dtype == jnp.float32
    assert bool(jnp.isfinite(out).all())
    print("KERNEL_OK")
</pallas_src>

<mosaic_0001>
module attributes {stable_mosaic.version = 11 : i64} {
  func.func @reducer_kv_kernel(%arg0: memref<128x64xf32, #tpu.memory_space<vmem>>, %arg1: memref<128x64xf32, #tpu.memory_space<vmem>>, %arg2: memref<32x128xbf16, #tpu.memory_space<vmem>>, %arg3: memref<32x1xf32, #tpu.memory_space<vmem>>, %arg4: memref<32x1xf32, #tpu.memory_space<vmem>>, %arg5: memref<32x1xf32, #tpu.memory_space<vmem>>, %arg6: memref<64x32xbf16, #tpu.memory_space<vmem>>, %arg7: memref<64x1xf32, #tpu.memory_space<vmem>>, %arg8: memref<64x64xf32, #tpu.memory_space<vmem>>) attributes {dimension_semantics = [], scalar_prefetch = 0 : i64, scratch_operands = 0 : i64, tpu.core_type = #tpu.core_type<tc>} {
    %c0 = arith.constant 0 : index
    %c0_0 = arith.constant 0 : index
    %0 = vector.load %arg0[%c0, %c0_0] : memref<128x64xf32, #tpu.memory_space<vmem>>, vector<128x64xf32>
    %c0_1 = arith.constant 0 : index
    %c0_2 = arith.constant 0 : index
    %1 = vector.load %arg1[%c0_1, %c0_2] : memref<128x64xf32, #tpu.memory_space<vmem>>, vector<128x64xf32>
    %2 = arith.addf %0, %1 : vector<128x64xf32>
    %3 = arith.truncf %2 : vector<128x64xf32> to vector<128x64xbf16>
    %c0_3 = arith.constant 0 : index
    %c0_4 = arith.constant 0 : index
    %4 = vector.load %arg2[%c0_3, %c0_4] : memref<32x128xbf16, #tpu.memory_space<vmem>>, vector<32x128xbf16>
    %cst = arith.constant dense<0.000000e+00> : vector<32x64xf32>
    %5 = tpu.matmul %4, %3, %cst {dimension_numbers = #tpu.dot_dimension_numbers<[1], [0], [0], [1], [0, 0, 1, 1], [], []>} : vector<32x128xbf16>, vector<128x64xbf16>, vector<32x64xf32> -> vector<32x64xf32>
    %c0_5 = arith.constant 0 : index
    %c0_6 = arith.constant 0 : index
    %6 = vector.load %arg3[%c0_5, %c0_6] : memref<32x1xf32, #tpu.memory_space<vmem>>, vector<32x1xf32>
    %7 = vector.broadcast %6 : vector<32x1xf32> to vector<32x64xf32>
    %8 = arith.addf %5, %7 : vector<32x64xf32>
    %cst_7 = arith.constant dense<0.000000e+00> : vector<64xf32>
    %9 = vector.multi_reduction <add>, %8, %cst_7 [0] : vector<32x64xf32> to vector<64xf32>
    %10 = vector.shape_cast %9 : vector<64xf32> to vector<1x64xf32>
    %cst_8 = arith.constant 3.200000e+01 : f32
    %11 = vector.broadcast %cst_8 : f32 to vector<1x64xf32>
    %12 = arith.divf %10, %11 : vector<1x64xf32>
    %13 = vector.broadcast %12 : vector<1x64xf32> to vector<32x64xf32>
    %14 = arith.subf %8, %13 : vector<32x64xf32>
    %15 = arith.mulf %14, %14 : vector<32x64xf32>
    %cst_9 = arith.constant dense<0.000000e+00> : vector<64xf32>
    %16 = vector.multi_reduction <add>, %15, %cst_9 [0] : vector<32x64xf32> to vector<64xf32>
    %17 = vector.shape_cast %16 : vector<64xf32> to vector<1x64xf32>
    %cst_10 = arith.constant 3.200000e+01 : f32
    %18 = vector.broadcast %cst_10 : f32 to vector<1x64xf32>
    %19 = arith.divf %17, %18 : vector<1x64xf32>
    %cst_11 = arith.constant 9.99999974E-6 : f32
    %20 = vector.broadcast %cst_11 : f32 to vector<1x64xf32>
    %21 = arith.addf %19, %20 : vector<1x64xf32>
    %22 = math.rsqrt %21 : vector<1x64xf32>
    %23 = vector.broadcast %22 : vector<1x64xf32> to vector<32x64xf32>
    %24 = arith.mulf %14, %23 : vector<32x64xf32>
    %c0_12 = arith.constant 0 : index
    %c0_13 = arith.constant 0 : index
    %25 = vector.load %arg4[%c0_12, %c0_13] : memref<32x1xf32, #tpu.memory_space<vmem>>, vector<32x1xf32>
    %26 = vector.broadcast %25 : vector<32x1xf32> to vector<32x64xf32>
    %27 = arith.mulf %24, %26 : vector<32x64xf32>
    %c0_14 = arith.constant 0 : index
    %c0_15 = arith.constant 0 : index
    %28 = vector.load %arg5[%c0_14, %c0_15] : memref<32x1xf32, #tpu.memory_space<vmem>>, vector<32x1xf32>
    %29 = vector.broadcast %28 : vector<32x1xf32> to vector<32x64xf32>
    %30 = arith.addf %27, %29 : vector<32x64xf32>
    %31 = arith.truncf %30 : vector<32x64xf32> to vector<32x64xbf16>
    %c0_16 = arith.constant 0 : index
    %c0_17 = arith.constant 0 : index
    %32 = vector.load %arg6[%c0_16, %c0_17] : memref<64x32xbf16, #tpu.memory_space<vmem>>, vector<64x32xbf16>
    %cst_18 = arith.constant dense<0.000000e+00> : vector<64x64xf32>
    %33 = tpu.matmul %32, %31, %cst_18 {dimension_numbers = #tpu.dot_dimension_numbers<[1], [0], [0], [1], [0, 0, 1, 1], [], []>} : vector<64x32xbf16>, vector<32x64xbf16>, vector<64x64xf32> -> vector<64x64xf32>
    %c0_19 = arith.constant 0 : index
    %c0_20 = arith.constant 0 : index
    %34 = vector.load %arg7[%c0_19, %c0_20] : memref<64x1xf32, #tpu.memory_space<vmem>>, vector<64x1xf32>
    %35 = vector.broadcast %34 : vector<64x1xf32> to vector<64x64xf32>
    %36 = arith.addf %33, %35 : vector<64x64xf32>
    %c0_21 = arith.constant 0 : index
    %c0_22 = arith.constant 0 : index
    %37 = vector.load %arg8[%c0_21, %c0_22] : memref<64x64xf32, #tpu.memory_space<vmem>>, vector<64x64xf32>
    tpu.vector_store %arg8[%c0_21, %c0_22], %36 {strides = array<i32>} : memref<64x64xf32, #tpu.memory_space<vmem>>, vector<64x64xf32>,
    return
  }
}

module attributes {stable_mosaic.version = 11 : i64} {
  func.func @attention_kernel(%arg0: i32, %arg1: memref<32x128xf32, #tpu.memory_space<vmem>>, %arg2: memref<32x128xf32, #tpu.memory_space<vmem>>, %arg3: memref<64x64xf32, #tpu.memory_space<vmem>>, %arg4: memref<32x32xbf16, #tpu.memory_space<vmem>>, %arg5: memref<32x1xf32, #tpu.memory_space<vmem>>, %arg6: memref<32x32xbf16, #tpu.memory_space<vmem>>, %arg7: memref<32x1xf32, #tpu.memory_space<vmem>>, %arg8: memref<32x128xf32, #tpu.memory_space<vmem>>) attributes {dimension_semantics = [#tpu.dimension_semantics<parallel>], iteration_bounds = array<i64: 2>, scalar_prefetch = 0 : i64, scratch_operands = 0 : i64, tpu.core_type = #tpu.core_type<tc>, window_params = [{transform_indices = @transform_0, window_bounds = array<i64: 32, 128>}, {transform_indices = @transform_1, window_bounds = array<i64: 32, 128>}, {pipeline_mode = #tpu.pipeline_mode<synchronous>, transform_indices = @transform_2, window_bounds = array<i64: 64, 64>}, {pipeline_mode = #tpu.pipeline_mode<synchronous>, transform_indices = @transform_3, window_bounds = array<i64: 32, 32>}, {pipeline_mode = #tpu.pipeline_mode<synchronous>, transform_indices = @transform_4, window_bounds = array<i64: 32, 1>}, {pipeline_mode = #tpu.pipeline_mode<synchronous>, transform_indices = @transform_5, window_bounds = array<i64: 32, 32>}, {pipeline_mode = #tpu.pipeline_mode<synchronous>, transform_indices = @transform_6, window_bounds = array<i64: 32, 1>}, {transform_indices = @transform_7, window_bounds = array<i64: 32, 128>}]} {
    %c0 = arith.constant 0 : index
    %c0_0 = arith.constant 0 : index
    %0 = vector.load %arg1[%c0, %c0_0] : memref<32x128xf32, #tpu.memory_space<vmem>>, vector<32x128xf32>
    %c0_1 = arith.constant 0 : index
    %c0_2 = arith.constant 0 : index
    %1 = vector.load %arg2[%c0_1, %c0_2] : memref<32x128xf32, #tpu.memory_space<vmem>>, vector<32x128xf32>
    %2 = arith.addf %0, %1 : vector<32x128xf32>
    %3 = arith.truncf %2 : vector<32x128xf32> to vector<32x128xbf16>
    %c0_3 = arith.constant 0 : index
    %c0_4 = arith.constant 0 : index
    %4 = vector.load %arg4[%c0_3, %c0_4] : memref<32x32xbf16, #tpu.memory_space<vmem>>, vector<32x32xbf16>
    %cst = arith.constant dense<0.000000e+00> : vector<32x128xf32>
    %5 = tpu.matmul %4, %3, %cst {dimension_numbers = #tpu.dot_dimension_numbers<[1], [0], [0], [1], [0, 0, 1, 1], [], []>} : vector<32x32xbf16>, vector<32x128xbf16>, vector<32x128xf32> -> vector<32x128xf32>
    %c0_5 = arith.constant 0 : index
    %c0_6 = arith.constant 0 : index
    %6 = vector.load %arg5[%c0_5, %c0_6] : memref<32x1xf32, #tpu.memory_space<vmem>>, vector<32x1xf32>
    %7 = vector.broadcast %6 : vector<32x1xf32> to vector<32x128xf32>
    %8 = arith.addf %5, %7 : vector<32x128xf32>
    %cst_7 = arith.constant 0.353553385 : f32
    %9 = vector.broadcast %cst_7 : f32 to vector<32x128xf32>
    %10 = arith.mulf %8, %9 : vector<32x128xf32>
    %c0_8 = arith.constant 0 : index
    %c0_9 = arith.constant 0 : index
    %11 = vector.load %arg3[%c0_8, %c0_9] : memref<64x64xf32, #tpu.memory_space<vmem>>, vector<64x64xf32>
    %12 = vector.extract_strided_slice %11 {offsets = [0, 0], sizes = [32, 64], strides = [1, 1]} : vector<64x64xf32> to vector<32x64xf32>
    %13 = vector.extract_strided_slice %11 {offsets = [32, 0], sizes = [32, 64], strides = [1, 1]} : vector<64x64xf32> to vector<32x64xf32>
    %14 = vector.shape_cast %10 : vector<32x128xf32> to vector<4x8x128xf32>
    %15 = tpu.transpose %14, [0, 2, 1] : vector<4x8x128xf32> -> vector<4x128x8xf32>
    %16 = arith.truncf %15 : vector<4x128x8xf32> to vector<4x128x8xbf16>
    %17 = vector.shape_cast %12 : vector<32x64xf32> to vector<4x8x64xf32>
    %18 = arith.truncf %17 : vector<4x8x64xf32> to vector<4x8x64xbf16>
    %19 = vector.shape_cast %13 : vector<32x64xf32> to vector<4x8x64xf32>
    %20 = arith.truncf %19 : vector<4x8x64xf32> to vector<4x8x64xbf16>
    "tpu.trace_start"() <{level = 10 : i32, message = "hnd,hdm->hnm"}> : () -> ()
    %cst_10 = arith.constant dense<0.000000e+00> : vector<4x128x64xf32>
    %21 = tpu.matmul %16, %18, %cst_10 {dimension_numbers = #tpu.dot_dimension_numbers<[2], [1], [1], [2], [0, 0, 0, 1, 1, 2], [0], [0]>} : vector<4x128x8xbf16>, vector<4x8x64xbf16>, vector<4x128x64xf32> -> vector<4x128x64xf32>
    "tpu.trace_stop"() : () -> ()
    %cst_11 = arith.constant dense<0xFF800000> : vector<4x128xf32>
    %22 = vector.multi_reduction <maximumf>, %21, %cst_11 [2] : vector<4x128x64xf32> to vector<4x128xf32>
    %23 = vector.shape_cast %22 : vector<4x128xf32> to vector<4x128x1xf32>
    %24 = vector.broadcast %23 : vector<4x128x1xf32> to vector<4x128x64xf32>
    %25 = arith.subf %21, %24 : vector<4x128x64xf32>
    %26 = math.exp %25 : vector<4x128x64xf32>
    %cst_12 = arith.constant dense<0.000000e+00> : vector<4x128xf32>
    %27 = vector.multi_reduction <add>, %26, %cst_12 [2] : vector<4x128x64xf32> to vector<4x128xf32>
    %28 = vector.shape_cast %27 : vector<4x128xf32> to vector<4x128x1xf32>
    %29 = vector.broadcast %28 : vector<4x128x1xf32> to vector<4x128x64xf32>
    %30 = arith.divf %26, %29 : vector<4x128x64xf32>
    %31 = arith.truncf %30 : vector<4x128x64xf32> to vector<4x128x64xbf16>
    "tpu.trace_start"() <{level = 10 : i32, message = "hdm,hnm->hdn"}> : () -> ()
    %cst_13 = arith.constant dense<0.000000e+00> : vector<4x8x128xf32>
    %32 = tpu.matmul %20, %31, %cst_13 {dimension_numbers = #tpu.dot_dimension_numbers<[2], [2], [1], [1], [0, 0, 0, 1, 1, 1], [0], [0]>} : vector<4x8x64xbf16>, vector<4x128x64xbf16>, vector<4x8x128xf32> -> vector<4x8x128xf32>
    "tpu.trace_stop"() : () -> ()
    %33 = vector.shape_cast %32 : vector<4x8x128xf32> to vector<32x128xf32>
    %34 = arith.truncf %33 : vector<32x128xf32> to vector<32x128xbf16>
    %c0_14 = arith.constant 0 : index
    %c0_15 = arith.constant 0 : index
    %35 = vector.load %arg6[%c0_14, %c0_15] : memref<32x32xbf16, #tpu.memory_space<vmem>>, vector<32x32xbf16>
    %cst_16 = arith.constant dense<0.000000e+00> : vector<32x128xf32>
    %36 = tpu.matmul %35, %34, %cst_16 {dimension_numbers = #tpu.dot_dimension_numbers<[1], [0], [0], [1], [0, 0, 1, 1], [], []>} : vector<32x32xbf16>, vector<32x128xbf16>, vector<32x128xf32> -> vector<32x128xf32>
    %c0_17 = arith.constant 0 : index
    %c0_18 = arith.constant 0 : index
    %37 = vector.load %arg7[%c0_17, %c0_18] : memref<32x1xf32, #tpu.memory_space<vmem>>, vector<32x1xf32>
    %38 = vector.broadcast %37 : vector<32x1xf32> to vector<32x128xf32>
    %39 = arith.addf %36, %38 : vector<32x128xf32>
    %c0_19 = arith.constant 0 : index
    %c0_20 = arith.constant 0 : index
    %40 = vector.load %arg8[%c0_19, %c0_20] : memref<32x128xf32, #tpu.memory_space<vmem>>, vector<32x128xf32>
    tpu.vector_store %arg8[%c0_19, %c0_20], %39 {strides = array<i32>} : memref<32x128xf32, #tpu.memory_space<vmem>>, vector<32x128xf32>,
    return
  }
  func.func @transform_0(%arg0: i32) -> (i32, i32) {
    %c0_i32 = arith.constant 0 : i32
    %c0_i32_0 = arith.constant 0 : i32
    return %c0_i32, %arg0 : i32, i32
  }
  func.func @transform_1(%arg0: i32) -> (i32, i32) {
    %c0_i32 = arith.constant 0 : i32
    %c0_i32_0 = arith.constant 0 : i32
    return %c0_i32, %arg0 : i32, i32
  }
  func.func @transform_2(%arg0: i32) -> (i32, i32) {
    %c0_i32 = arith.constant 0 : i32
    %c0_i32_0 = arith.constant 0 : i32
    %c0_i32_1 = arith.constant 0 : i32
    return %c0_i32, %c0_i32_0 : i32, i32
  }
  func.func @transform_3(%arg0: i32) -> (i32, i32) {
    %c0_i32 = arith.constant 0 : i32
    %c0_i32_0 = arith.constant 0 : i32
    %c0_i32_1 = arith.constant 0 : i32
    return %c0_i32, %c0_i32_0 : i32, i32
  }
  func.func @transform_4(%arg0: i32) -> (i32, i32) {
    %c0_i32 = arith.constant 0 : i32
    %c0_i32_0 = arith.constant 0 : i32
    %c0_i32_1 = arith.constant 0 : i32
    return %c0_i32, %c0_i32_0 : i32, i32
  }
  func.func @transform_5(%arg0: i32) -> (i32, i32) {
    %c0_i32 = arith.constant 0 : i32
    %c0_i32_0 = arith.constant 0 : i32
    %c0_i32_1 = arith.constant 0 : i32
    return %c0_i32, %c0_i32_0 : i32, i32
  }
  func.func @transform_6(%arg0: i32) -> (i32, i32) {
    %c0_i32 = arith.constant 0 : i32
    %c0_i32_0 = arith.constant 0 : i32
    %c0_i32_1 = arith.constant 0 : i32
    return %c0_i32, %c0_i32_0 : i32, i32
  }
  func.func @transform_7(%arg0: i32) -> (i32, i32) {
    %c0_i32 = arith.constant 0 : i32
    %c0_i32_0 = arith.constant 0 : i32
    return %c0_i32, %arg0 : i32, i32
  }
}

</mosaic_0001>

<llo_original>
// kernel: efficient_mha.2
$region0: #{efficient_mha.2}
  #allocation0 [shape = 'u32[]', space=smem, size = 0x4, offset = 0x4, fixed_abs, tag = 'smem constant byte address 0x4 - core index']
  #allocation1 [shape = 'u32[144,128]{1,0:T(1,128)}', space=vmem, size = 0x12000, scoped, tag = 'internal scratch']
  %s0 = inlined_call_operand.vmem [shape: f32[128,64], index: 0, kind: input, shape index: {}]
  %s1 = inlined_call_operand.vmem [shape: f32[128,64], index: 1, kind: input, shape index: {}]
  %s2 = inlined_call_operand.vmem [shape: bf16[32,128], index: 2, kind: input, shape index: {}]
  %s3 = inlined_call_operand.vmem [shape: f32[32,1], index: 3, kind: input, shape index: {}]
  %s4 = inlined_call_operand.vmem [shape: f32[32,1], index: 4, kind: input, shape index: {}]
  %s5 = inlined_call_operand.vmem [shape: f32[32,1], index: 5, kind: input, shape index: {}]
  %s6 = inlined_call_operand.vmem [shape: bf16[64,32], index: 6, kind: input, shape index: {}]
  %s7 = inlined_call_operand.vmem [shape: f32[64,1], index: 7, kind: input, shape index: {}]
  %s8 = inlined_call_operand.vmem [shape: f32[64,64], index: 8, kind: output, shape index: {}]
  %s9 = sld [smem:[#allocation0]]
  $region42: #{efficient_mha.2} parent=0
    _
  %s11 = ssub.s32 1, %s9
  %s12 = scalar_select 0, %s11, %s9
  // Predicated region
  $region2: #{efficient_mha.2} parent=0 // pred_check
    _
  $region3: #{efficient_mha.2} parent=0 // pred_check_branch
    %14 = sbr.rel (0) target = $region5
  $region4: #{efficient_mha.2} parent=0 // pred_region
    _
  $region5: #{efficient_mha.2} parent=0 // pred_fallthru
    _
  // Predicated region
  $region6: #{efficient_mha.2} parent=0 // pred_check
    _
  $region7: #{efficient_mha.2} parent=0 // pred_check_branch
    %16 = sbr.rel (0) target = $region9
  $region8: #{efficient_mha.2} parent=0 // pred_region
    _
  $region9: #{efficient_mha.2} parent=0 // pred_fallthru
    _
  // Predicated region
  $region10: #{efficient_mha.2} parent=0 // pred_check
    _
  $region11: #{efficient_mha.2} parent=0 // pred_check_branch
    %18 = sbr.rel (0) target = $region13
  $region12: #{efficient_mha.2} parent=0 // pred_region
    _
  $region13: #{efficient_mha.2} parent=0 // pred_fallthru
    _
  // Predicated region
  $region14: #{efficient_mha.2} parent=0 // pred_check
    _
  $region15: #{efficient_mha.2} parent=0 // pred_check_branch
    %20 = sbr.rel (0) target = $region17
  $region16: #{efficient_mha.2} parent=0 // pred_region
    _
  $region17: #{efficient_mha.2} parent=0 // pred_fallthru
    _
  // Predicated region
  $region18: #{efficient_mha.2} parent=0 // pred_check
    _
  $region19: #{efficient_mha.2} parent=0 // pred_check_branch
    %22 = sbr.rel (0) target = $region21
  $region20: #{efficient_mha.2} parent=0 // pred_region
    _
  $region21: #{efficient_mha.2} parent=0 // pred_fallthru
    _
  // Predicated region
  $region22: #{efficient_mha.2} parent=0 // pred_check
    _
  $region23: #{efficient_mha.2} parent=0 // pred_check_branch
    %24 = sbr.rel (0) target = $region25
  $region24: #{efficient_mha.2} parent=0 // pred_region
    _
  $region25: #{efficient_mha.2} parent=0 // pred_fallthru
    _
  // Predicated region
  $region26: #{efficient_mha.2} parent=0 // pred_check
    _
  $region27: #{efficient_mha.2} parent=0 // pred_check_branch
    %26 = sbr.rel (0) target = $region29
  $region28: #{efficient_mha.2} parent=0 // pred_region
    _
  $region29: #{efficient_mha.2} parent=0 // pred_fallthru
    _
  // Predicated region
  $region30: #{efficient_mha.2} parent=0 // pred_check
    _
  $region31: #{efficient_mha.2} parent=0 // pred_check_branch
    %28 = sbr.rel (0) target = $region33
  $region32: #{efficient_mha.2} parent=0 // pred_region
    _
  $region33: #{efficient_mha.2} parent=0 // pred_fallthru
    _
  %v30 = vld [vmem:[%s0] sm:$0xff]
  %v31 = vld [vmem:[%s0 + $0x8] sm:$0xff]
  %v32 = vld [vmem:[%s0 + $0x10] sm:$0xff]
  %v33 = vld [vmem:[%s0 + $0x18] sm:$0xff]
  %v34 = vld [vmem:[%s0 + $0x20] sm:$0xff]
  %v35 = vld [vmem:[%s0 + $0x28] sm:$0xff]
  %v36 = vld [vmem:[%s0 + $0x30] sm:$0xff]
  %v37 = vld [vmem:[%s0 + $0x38] sm:$0xff]
  %v38 = vld [vmem:[%s0 + $0x40] sm:$0xff]
  %v39 = vld [vmem:[%s0 + $0x48] sm:$0xff]
  %v40 = vld [vmem:[%s0 + $0x50] sm:$0xff]
  %v41 = vld [vmem:[%s0 + $0x58] sm:$0xff]
  %v42 = vld [vmem:[%s0 + $0x60] sm:$0xff]
  %v43 = vld [vmem:[%s0 + $0x68] sm:$0xff]
  %v44 = vld [vmem:[%s0 + $0x70] sm:$0xff]
  %v45 = vld [vmem:[%s0 + $0x78] sm:$0xff]
  %v46 = vld [vmem:[%s1] sm:$0xff]
  %v47 = vld [vmem:[%s1 + $0x8] sm:$0xff]
  %v48 = vld [vmem:[%s1 + $0x10] sm:$0xff]
  %v49 = vld [vmem:[%s1 + $0x18] sm:$0xff]
  %v50 = vld [vmem:[%s1 + $0x20] sm:$0xff]
  %v51 = vld [vmem:[%s1 + $0x28] sm:$0xff]
  %v52 = vld [vmem:[%s1 + $0x30] sm:$0xff]
  %v53 = vld [vmem:[%s1 + $0x38] sm:$0xff]
  %v54 = vld [vmem:[%s1 + $0x40] sm:$0xff]
  %v55 = vld [vmem:[%s1 + $0x48] sm:$0xff]
  %v56 = vld [vmem:[%s1 + $0x50] sm:$0xff]
  %v57 = vld [vmem:[%s1 + $0x58] sm:$0xff]
  %v58 = vld [vmem:[%s1 + $0x60] sm:$0xff]
  %v59 = vld [vmem:[%s1 + $0x68] sm:$0xff]
  %v60 = vld [vmem:[%s1 + $0x70] sm:$0xff]
  %v61 = vld [vmem:[%s1 + $0x78] sm:$0xff]
  %v62 = vadd.f32 %v30, %v46
  %v63 = vadd.f32 %v31, %v47
  %v64 = vadd.f32 %v32, %v48
  %v65 = vadd.f32 %v33, %v49
  %v66 = vadd.f32 %v34, %v50
  %v67 = vadd.f32 %v35, %v51
  %v68 = vadd.f32 %v36, %v52
  %v69 = vadd.f32 %v37, %v53
  %v70 = vadd.f32 %v38, %v54
  %v71 = vadd.f32 %v39, %v55
  %v72 = vadd.f32 %v40, %v56
  %v73 = vadd.f32 %v41, %v57
  %v74 = vadd.f32 %v42, %v58
  %v75 = vadd.f32 %v43, %v59
  %v76 = vadd.f32 %v44, %v60
  %v77 = vadd.f32 %v45, %v61
  %v78 = vpack.c.bf16 %v63, %v62
  %v79 = vpack.c.bf16 %v65, %v64
  %v80 = vpack.c.bf16 %v67, %v66
  %v81 = vpack.c.bf16 %v69, %v68
  %v82 = vpack.c.bf16 %v71, %v70
  %v83 = vpack.c.bf16 %v73, %v72
  %v84 = vpack.c.bf16 %v75, %v74
  %v85 = vpack.c.bf16 %v77, %v76
  %v86 = vld [vmem:[%s2] sm:$0xf]
  %v87 = vld [vmem:[%s2 + $0x4] sm:$0xf]
  %v88 = vld [vmem:[%s2 + $0x8] sm:$0xf]
  %v89 = vld [vmem:[%s2 + $0xc] sm:$0xf]
  %v90 = vld [vmem:[%s3] sm:$0xff]
  %v91 = vld [vmem:[%s3 + $0x8] sm:$0xff]
  %v92 = vld [vmem:[%s3 + $0x10] sm:$0xff]
  %v93 = vld [vmem:[%s3 + $0x18] sm:$0xff]
  %95 = vset.pattern.permute.xlu0 0
  %96 = vperm.xlu0 %95, %v90
  %v97 = vpop.permute.xlu0 %96
  %100 = vset.pattern.permute.xlu0 0
  %101 = vperm.xlu0 %100, %v91
  %v102 = vpop.permute.xlu0 %101
  %105 = vset.pattern.permute.xlu0 0
  %106 = vperm.xlu0 %105, %v92
  %v107 = vpop.permute.xlu0 %106
  %110 = vset.pattern.permute.xlu0 0
  %111 = vperm.xlu0 %110, %v93
  %v112 = vpop.permute.xlu0 %111
  %v118 = vunpack.c.l.b16 %v86
  %v119 = vunpack.c.l.b16 %v87
  %v120 = vunpack.c.l.b16 %v88
  %v121 = vunpack.c.l.b16 %v89
  %v122 = vpack.c.b16 %v119, %v118
  %v123 = vpack.c.b16 %v121, %v120
  %126 = vmatprep.subr.bf16.mxu0 0
  %127 = vmatpush1.bf16.msra.mxu0 %v85
  %128 = vmatprep.subr.bf16.mxu0 0
  %129 = vmatpush1.bf16.msra.mxu0 %v84
  %130 = vmatprep.subr.bf16.mxu0 0
  %131 = vmatpush1.bf16.msra.mxu0 %v83
  %132 = vmatprep.subr.bf16.mxu0 0
  %133 = vmatpush1.bf16.msra.mxu0 %v82
  %134 = vmatprep.subr.bf16.mxu0 0
  %135 = vmatpush1.bf16.msra.mxu0 %v81
  %136 = vmatprep.subr.bf16.mxu0 0
  %137 = vmatpush1.bf16.msra.mxu0 %v80
  %138 = vmatprep.subr.bf16.mxu0 0
  %139 = vmatpush1.bf16.msra.mxu0 %v79
  %140 = vmatprep.subr.bf16.mxu0 0
  %141 = vmatpush1.bf16.msra.mxu0 %v78
  %142 = vmatprep.subr.bf16.mxu0 0
  %143 = vmatpush2.bf16.msra.mxu0 0
  %144 = vmatprep.subr.bf16.mxu0 0
  %145 = vmatpush2.bf16.msra.mxu0 0
  %146 = vmatprep.subr.bf16.mxu0 0
  %147 = vmatpush2.bf16.msra.mxu0 0
  %148 = vmatprep.subr.bf16.mxu0 0
  %149 = vmatpush2.bf16.msra.mxu0 0
  %150 = vmatprep.subr.bf16.mxu0 0
  %151 = vmatpush2.bf16.msra.mxu0 0
  %152 = vmatprep.subr.bf16.mxu0 0
  %153 = vmatpush2.bf16.msra.mxu0 0
  %154 = vmatprep.subr.bf16.mxu0 0
  %155 = vmatpush2.bf16.msra.mxu0 0
  %156 = vmatprep.subr.bf16.mxu0 0
  %157 = vmatpush2.bf16.msra.mxu0 0
  %158 = vmatprep.mubr.bf16.mxu0 0
  %159 = vmatmul.mubr.bf16.gmra.mxu0 %v122
  %v160 = vpop.f32.mrf.mxu0
  %v161 = vadd.f32 %v97, %v160
  %v162 = vpop.f32.mrf.mxu0
  %v163 = vpop.f32.mrf.mxu0
  %v164 = vadd.f32 %v102, %v163
  %v165 = vpop.f32.mrf.mxu0
  %166 = vmatprep.mubr.bf16.mxu0 0
  %167 = vmatmul.mubr.bf16.gmra.mxu0 %v123
  %v168 = vpop.f32.mrf.mxu0
  %v169 = vadd.f32 %v107, %v168
  %v170 = vpop.f32.mrf.mxu0
  %v171 = vpop.f32.mrf.mxu0
  %v172 = vadd.f32 %v112, %v171
  %v173 = vpop.f32.mrf.mxu0
  %174 = vdwg.mxu0
  %vm175 = vcmask 523264
  %v176 = vsel %vm175, %v161, 0.0
  %v177 = vsel %vm175, %v164, 0.0
  %v178 = vadd.f32 %v176, %v177
  %v179 = vsel %vm175, %v169, 0.0
  %v180 = vadd.f32 %v178, %v179
  %v181 = vsel %vm175, %v172, 0.0
  %v182 = vadd.f32 %v180, %v181
  %v183 = vrot.slane %v182, 4
  %v184 = vadd.f32 %v182, %v183
  %v185 = vrot.slane %v184, 2
  %v186 = vadd.f32 %v184, %v185
  %v187 = vrot.slane %v186, 1
  %v188 = vadd.f32 %v186, %v187
  %v189 = vrcp.pop 32.0
  %v190 = vmul.f32 %v188, %v189
  %v191 = vsub.f32 %v161, %v190
  %v192 = vsub.f32 %v164, %v190
  %v193 = vsub.f32 %v169, %v190
  %v194 = vsub.f32 %v172, %v190
  %v195 = vmul.f32 %v191, %v191
  %v196 = vmul.f32 %v192, %v192
  %v197 = vmul.f32 %v193, %v193
  %v198 = vmul.f32 %v194, %v194
  %v199 = vsel %vm175, %v195, 0.0
  %v200 = vsel %vm175, %v196, 0.0
  %v201 = vadd.f32 %v199, %v200
  %v202 = vsel %vm175, %v197, 0.0
  %v203 = vadd.f32 %v201, %v202
  %v204 = vsel %vm175, %v198, 0.0
  %v205 = vadd.f32 %v203, %v204
  %v206 = vrot.slane %v205, 4
  %v207 = vadd.f32 %v205, %v206
  %v208 = vrot.slane %v207, 2
  %v209 = vadd.f32 %v207, %v208
  %v210 = vrot.slane %v209, 1
  %v211 = vadd.f32 %v209, %v210
  %v212 = vmul.f32 %v211, %v189
  %v213 = vadd.f32 %v212, 1e-05
  %v214 = vrsqrt.pop %v213
  %v215 = vmul.f32 %v191, %v214
  %v216 = vmul.f32 %v192, %v214
  %v217 = vmul.f32 %v193, %v214
  %v218 = vmul.f32 %v194, %v214
  %v219 = vld [vmem:[%s4] sm:$0xff]
  %v220 = vld [vmem:[%s4 + $0x8] sm:$0xff]
  %v221 = vld [vmem:[%s4 + $0x10] sm:$0xff]
  %v222 = vld [vmem:[%s4 + $0x18] sm:$0xff]
  %224 = vset.pattern.permute.xlu0 0
  %225 = vperm.xlu0 %224, %v219
  %v226 = vpop.permute.xlu0 %225
  %229 = vset.pattern.permute.xlu0 0
  %230 = vperm.xlu0 %229, %v220
  %v231 = vpop.permute.xlu0 %230
  %234 = vset.pattern.permute.xlu0 0
  %235 = vperm.xlu0 %234, %v221
  %v236 = vpop.permute.xlu0 %235
  %239 = vset.pattern.permute.xlu0 0
  %240 = vperm.xlu0 %239, %v222
  %v241 = vpop.permute.xlu0 %240
  %v243 = vmul.f32 %v215, %v226
  %v244 = vmul.f32 %v216, %v231
  %v245 = vmul.f32 %v217, %v236
  %v246 = vmul.f32 %v218, %v241
  %v247 = vld [vmem:[%s5] sm:$0xff]
  %v248 = vld [vmem:[%s5 + $0x8] sm:$0xff]
  %v249 = vld [vmem:[%s5 + $0x10] sm:$0xff]
  %v250 = vld [vmem:[%s5 + $0x18] sm:$0xff]
  %252 = vset.pattern.permute.xlu0 0
  %253 = vperm.xlu0 %252, %v247
  %v254 = vpop.permute.xlu0 %253
  %257 = vset.pattern.permute.xlu0 0
  %258 = vperm.xlu0 %257, %v248
  %v259 = vpop.permute.xlu0 %258
  %262 = vset.pattern.permute.xlu0 0
  %263 = vperm.xlu0 %262, %v249
  %v264 = vpop.permute.xlu0 %263
  %267 = vset.pattern.permute.xlu0 0
  %268 = vperm.xlu0 %267, %v250
  %v269 = vpop.permute.xlu0 %268
  %v271 = vadd.f32 %v243, %v254
  %v272 = vadd.f32 %v244, %v259
  %v273 = vadd.f32 %v245, %v264
  %v274 = vadd.f32 %v246, %v269
  %v275 = vpack.c.bf16 %v272, %v271
  %v276 = vpack.c.bf16 %v274, %v273
  %v277 = vld [vmem:[%s6] sm:$0xf]
  %v278 = vld [vmem:[%s6 + $0x4] sm:$0xf]
  %v279 = vld [vmem:[%s6 + $0x8] sm:$0xf]
  %v280 = vld [vmem:[%s6 + $0xc] sm:$0xf]
  %v281 = vld [vmem:[%s6 + $0x10] sm:$0xf]
  %v282 = vld [vmem:[%s6 + $0x14] sm:$0xf]
  %v283 = vld [vmem:[%s6 + $0x18] sm:$0xf]
  %v284 = vld [vmem:[%s6 + $0x1c] sm:$0xf]
  %v285 = vld [vmem:[%s7] sm:$0xff]
  %v286 = vld [vmem:[%s7 + $0x8] sm:$0xff]
  %v287 = vld [vmem:[%s7 + $0x10] sm:$0xff]
  %v288 = vld [vmem:[%s7 + $0x18] sm:$0xff]
  %v289 = vld [vmem:[%s7 + $0x20] sm:$0xff]
  %v290 = vld [vmem:[%s7 + $0x28] sm:$0xff]
  %v291 = vld [vmem:[%s7 + $0x30] sm:$0xff]
  %v292 = vld [vmem:[%s7 + $0x38] sm:$0xff]
  %294 = vset.pattern.permute.xlu0 0
  %295 = vperm.xlu0 %294, %v285
  %v296 = vpop.permute.xlu0 %295
  %299 = vset.pattern.permute.xlu0 0
  %300 = vperm.xlu0 %299, %v286
  %v301 = vpop.permute.xlu0 %300
  %304 = vset.pattern.permute.xlu0 0
  %305 = vperm.xlu0 %304, %v287
  %v306 = vpop.permute.xlu0 %305
  %309 = vset.pattern.permute.xlu0 0
  %310 = vperm.xlu0 %309, %v288
  %v311 = vpop.permute.xlu0 %310
  %314 = vset.pattern.permute.xlu0 0
  %315 = vperm.xlu0 %314, %v289
  %v316 = vpop.permute.xlu0 %315
  %319 = vset.pattern.permute.xlu0 0
  %320 = vperm.xlu0 %319, %v290
  %v321 = vpop.permute.xlu0 %320
  %324 = vset.pattern.permute.xlu0 0
  %325 = vperm.xlu0 %324, %v291
  %v326 = vpop.permute.xlu0 %325
  %329 = vset.pattern.permute.xlu0 0
  %330 = vperm.xlu0 %329, %v292
  %v331 = vpop.permute.xlu0 %330
  %v341 = vunpack.c.l.b16 %v277
  %v342 = vunpack.c.l.b16 %v278
  %v343 = vunpack.c.l.b16 %v279
  %v344 = vunpack.c.l.b16 %v280
  %v345 = vunpack.c.l.b16 %v281
  %v346 = vunpack.c.l.b16 %v282
  %v347 = vunpack.c.l.b16 %v283
  %v348 = vunpack.c.l.b16 %v284
  %v349 = vpack.c.b16 %v342, %v341
  %v350 = vpack.c.b16 %v344, %v343
  %v351 = vpack.c.b16 %v346, %v345
  %v352 = vpack.c.b16 %v348, %v347
  %vm353 = vcmask 261120
  %v355 = vsel %vm353, %v349, 0
  %v358 = vsel %vm353, %v350, 0
  %v361 = vsel %vm353, %v351, 0
  %v364 = vsel %vm353, %v352, 0
  %366 = vmatprep.subr.bf16.mxu0 0
  %367 = vmatpush1.bf16.msra.mxu0 0
  %368 = vmatprep.subr.bf16.mxu0 0
  %369 = vmatpush1.bf16.msra.mxu0 0
  %370 = vmatprep.subr.bf16.mxu0 0
  %371 = vmatpush1.bf16.msra.mxu0 0
  %372 = vmatprep.subr.bf16.mxu0 0
  %373 = vmatpush1.bf16.msra.mxu0 0
  %374 = vmatprep.subr.bf16.mxu0 0
  %375 = vmatpush1.bf16.msra.mxu0 0
  %376 = vmatprep.subr.bf16.mxu0 0
  %377 = vmatpush1.bf16.msra.mxu0 0
  %378 = vmatprep.subr.bf16.mxu0 0
  %379 = vmatpush1.bf16.msra.mxu0 %v276
  %380 = vmatprep.subr.bf16.mxu0 0
  %381 = vmatpush1.bf16.msra.mxu0 %v275
  %382 = vmatprep.subr.bf16.mxu0 0
  %383 = vmatpush2.bf16.msra.mxu0 0
  %384 = vmatprep.subr.bf16.mxu0 0
  %385 = vmatpush2.bf16.msra.mxu0 0
  %386 = vmatprep.subr.bf16.mxu0 0
  %387 = vmatpush2.bf16.msra.mxu0 0
  %388 = vmatprep.subr.bf16.mxu0 0
  %389 = vmatpush2.bf16.msra.mxu0 0
  %390 = vmatprep.subr.bf16.mxu0 0
  %391 = vmatpush2.bf16.msra.mxu0 0
  %392 = vmatprep.subr.bf16.mxu0 0
  %393 = vmatpush2.bf16.msra.mxu0 0
  %394 = vmatprep.subr.bf16.mxu0 0
  %395 = vmatpush2.bf16.msra.mxu0 0
  %396 = vmatprep.subr.bf16.mxu0 0
  %397 = vmatpush2.bf16.msra.mxu0 0
  %398 = vmatprep.mubr.bf16.mxu0 0
  %399 = vmatmul.mubr.bf16.gmra.mxu0 %v355
  %v400 = vpop.f32.mrf.mxu0
  %v401 = vadd.f32 %v296, %v400
  %v402 = vpop.f32.mrf.mxu0
  %v403 = vpop.f32.mrf.mxu0
  %v404 = vadd.f32 %v301, %v403
  %v405 = vpop.f32.mrf.mxu0
  %406 = vmatprep.mubr.bf16.mxu0 0
  %407 = vmatmul.mubr.bf16.gmra.mxu0 %v358
  %v408 = vpop.f32.mrf.mxu0
  %v409 = vadd.f32 %v306, %v408
  %v410 = vpop.f32.mrf.mxu0
  %v411 = vpop.f32.mrf.mxu0
  %v412 = vadd.f32 %v311, %v411
  %v413 = vpop.f32.mrf.mxu0
  %414 = vmatprep.mubr.bf16.mxu0 0
  %415 = vmatmul.mubr.bf16.gmra.mxu0 %v361
  %v416 = vpop.f32.mrf.mxu0
  %v417 = vadd.f32 %v316, %v416
  %v418 = vpop.f32.mrf.mxu0
  %v419 = vpop.f32.mrf.mxu0
  %v420 = vadd.f32 %v321, %v419
  %v421 = vpop.f32.mrf.mxu0
  %422 = vmatprep.mubr.bf16.mxu0 0
  %423 = vmatmul.mubr.bf16.gmra.mxu0 %v364
  %v424 = vpop.f32.mrf.mxu0
  %v425 = vadd.f32 %v326, %v424
  %v426 = vpop.f32.mrf.mxu0
  %v427 = vpop.f32.mrf.mxu0
  %v428 = vadd.f32 %v331, %v427
  %v429 = vpop.f32.mrf.mxu0
  %430 = vdwg.mxu0
  %431 = vst.msk [vmem:[%s8] sm:$0xff] %vm175, %v401
  %432 = vst.msk [vmem:[%s8 + $0x8] sm:$0xff] %vm175, %v404
  %433 = vst.msk [vmem:[%s8 + $0x10] sm:$0xff] %vm175, %v409
  %434 = vst.msk [vmem:[%s8 + $0x18] sm:$0xff] %vm175, %v412
  %435 = vst.msk [vmem:[%s8 + $0x20] sm:$0xff] %vm175, %v417
  %436 = vst.msk [vmem:[%s8 + $0x28] sm:$0xff] %vm175, %v420
  %437 = vst.msk [vmem:[%s8 + $0x30] sm:$0xff] %vm175, %v425
  %438 = vst.msk [vmem:[%s8 + $0x38] sm:$0xff] %vm175, %v428
  // Predicated region
  $region34: #{efficient_mha.2} parent=0 // pred_check
    _
  $region35: #{efficient_mha.2} parent=0 // pred_check_branch
    %440 = sbr.rel (0) target = $region37
  $region36: #{efficient_mha.2} parent=0 // pred_region
    _
  $region37: #{efficient_mha.2} parent=0 // pred_fallthru
    _
  // Predicated region
  $region38: #{efficient_mha.2} parent=0 // pred_check
    _
  $region39: #{efficient_mha.2} parent=0 // pred_check_branch
    %442 = sbr.rel (0) target = $region41
  $region40: #{efficient_mha.2} parent=0 // pred_region
    _
  $region41: #{efficient_mha.2} parent=0 // pred_fallthru
    _

// kernel: efficient_mha.3
$region0: #{efficient_mha.3}
  #allocation0 [shape = 'u32[]', space=smem, size = 0x4, offset = 0x4, fixed_abs, tag = 'smem constant byte address 0x4 - core index']
  #allocation1 [shape = 'u32[144,128]{1,0:T(1,128)}', space=vmem, size = 0x12000, scoped, tag = 'internal scratch']
  %s0 = inlined_call_operand.vmem [shape: f32[32,256], index: 0, kind: input, shape index: {}]
  %s1 = inlined_call_operand.vmem [shape: f32[32,256], index: 1, kind: input, shape index: {}]
  %s2 = inlined_call_operand.vmem [shape: f32[64,64], index: 2, kind: input, shape index: {}]
  %s3 = inlined_call_operand.vmem [shape: bf16[32,32], index: 3, kind: input, shape index: {}]
  %s4 = inlined_call_operand.vmem [shape: f32[32,1], index: 4, kind: input, shape index: {}]
  %s5 = inlined_call_operand.vmem [shape: bf16[32,32], index: 5, kind: input, shape index: {}]
  %s6 = inlined_call_operand.vmem [shape: f32[32,1], index: 6, kind: input, shape index: {}]
  %s7 = inlined_call_operand.vmem [shape: f32[32,256], index: 7, kind: output, shape index: {}]
  %s8 = sld [smem:[#allocation0]]
  $region171: #{efficient_mha.3} parent=0
    _
  %s10 = ssub.s32 1, %s8
  %s11 = scalar_select 0, %s10, %s8
  $region1: #{efficient_mha.3} parent=0
    #allocation2 [shape = 'u8[32768]{0}', space=vmem, size = 0x8000, scoped, tag = 'input window, operand 0']
    #allocation3 [shape = 'u8[32768]{0}', space=vmem, size = 0x8000, scoped, tag = 'input window, operand 1']
    #allocation4 [shape = 'u8[32768]{0}', space=vmem, size = 0x8000, scoped, tag = 'output window, operand 0']
    loop: start=0, step=1, limit=4
    $region2: #{efficient_mha.3} parent=1 // loop_pre_header
      _
    $region3: #{efficient_mha.3} parent=1 // loop_header
      %s13 = sphi 0, %s17
      %p14 = scmp.ge.s32.totalorder %s13, 4
      %s23 = sphi 0, %s25
      %s26 = sphi 0, %s23
      %s27 = sphi 0, %s26
      %s43 = sphi 0, %s27
      %s49 = sphi 0, %s51
      %s52 = sphi 0, %s49
      %s53 = sphi 0, %s52
      %s69 = sphi 0, %s53
      %s73 = sphi 0, %s73
      %s75 = sphi 0, %s73
      %s76 = sphi 0, %s75
      %s90 = sphi 0, %s76
      %s94 = sphi 0, %s94
      %s96 = sphi 0, %s94
      %s97 = sphi 0, %s96
      %s111 = sphi 0, %s97
      %s115 = sphi 0, %s115
      %s117 = sphi 0, %s115
      %s118 = sphi 0, %s117
      %s132 = sphi 0, %s118
      %s136 = sphi 0, %s136
      %s138 = sphi 0, %s136
      %s139 = sphi 0, %s138
      %s153 = sphi 0, %s139
      %s157 = sphi 0, %s157
      %s159 = sphi 0, %s157
      %s160 = sphi 0, %s159
      %s174 = sphi 0, %s160
      %s180 = sphi 0, %s182
      %s183 = sphi 0, %s180
      %s184 = sphi 0, %s183
      %s200 = sphi 0, %s184
    $region4: #{efficient_mha.3} parent=1 // loop_header_branch
      %16 = sbr.rel (%p14) target = $region8
    $region5: #{efficient_mha.3} parent=1 // loop_body
      %s18 = ssub.s32 %s13, 1
      %s19 = ssub.s32 %s13, 2
      %s20 = sadd.s32 %s13, 1
      %s21 = ssub.s32 %s13, %s20
      %p22 = scmp.eq.s32.totalorder %s21, 0
      %s24 = sadd.s32 %s23, 1
      %s25 = scalar_select %p22, %s23, %s24
      %p28 = pneg %p22
      %p29 = scmp.eq.s32.totalorder %s13, 1
      %p30 = por %p28, %p29
      %p31 = scmp.ne.s32.totalorder %s23, %s26
      %p32 = scmp.eq.s32.totalorder %s13, 0
      %p33 = por %p31, %p32
      %p34 = scmp.ne.s32.totalorder %s23, %s26
      %p35 = scmp.eq.s32.totalorder %s18, 1
      %p36 = por %p34, %p35
      %p37 = scmp.ne.s32.totalorder %s26, %s27
      %p38 = scmp.eq.s32.totalorder %s18, 0
      %p39 = por %p37, %p38
      %p40 = scmp.ne.s32.totalorder %s26, %s27
      %p41 = scmp.eq.s32.totalorder %s19, 1
      %p42 = por %p40, %p41
      %p44 = scmp.ne.s32.totalorder %s27, %s43
      %p45 = scmp.eq.s32.totalorder %s19, 0
      %p46 = por %p44, %p45
      %s47 = ssub.s32 %s13, %s20
      %p48 = scmp.eq.s32.totalorder %s47, 0
      %s50 = sadd.s32 %s49, 1
      %s51 = scalar_select %p48, %s49, %s50
      %p54 = pneg %p48
      %p55 = scmp.eq.s32.totalorder %s13, 1
      %p56 = por %p54, %p55
      %p57 = scmp.ne.s32.totalorder %s49, %s52
      %p58 = scmp.eq.s32.totalorder %s13, 0
      %p59 = por %p57, %p58
      %p60 = scmp.ne.s32.totalorder %s49, %s52
      %p61 = scmp.eq.s32.totalorder %s18, 1
      %p62 = por %p60, %p61
      %p63 = scmp.ne.s32.totalorder %s52, %s53
      %p64 = scmp.eq.s32.totalorder %s18, 0
      %p65 = por %p63, %p64
      %p66 = scmp.ne.s32.totalorder %s52, %s53
      %p67 = scmp.eq.s32.totalorder %s19, 1
      %p68 = por %p66, %p67
      %p70 = scmp.ne.s32.totalorder %s53, %s69
      %p71 = scmp.eq.s32.totalorder %s19, 0
      %p72 = por %p70, %p71
      %s74 = sadd.s32 %s73, 1
      %p77 = scmp.eq.s32.totalorder %s13, 1
      %p78 = scmp.ne.s32.totalorder %s73, %s75
      %p79 = scmp.eq.s32.totalorder %s13, 0
      %p80 = por %p78, %p79
      %p81 = scmp.ne.s32.totalorder %s73, %s75
      %p82 = scmp.eq.s32.totalorder %s18, 1
      %p83 = por %p81, %p82
      %p84 = scmp.ne.s32.totalorder %s75, %s76
      %p85 = scmp.eq.s32.totalorder %s18, 0
      %p86 = por %p84, %p85
      %p87 = scmp.ne.s32.totalorder %s75, %s76
      %p88 = scmp.eq.s32.totalorder %s19, 1
      %p89 = por %p87, %p88
      %p91 = scmp.ne.s32.totalorder %s76, %s90
      %p92 = scmp.eq.s32.totalorder %s19, 0
      %p93 = por %p91, %p92
      %s95 = sadd.s32 %s94, 1
      %p98 = scmp.eq.s32.totalorder %s13, 1
      %p99 = scmp.ne.s32.totalorder %s94, %s96
      %p100 = scmp.eq.s32.totalorder %s13, 0
      %p101 = por %p99, %p100
      %p102 = scmp.ne.s32.totalorder %s94, %s96
      %p103 = scmp.eq.s32.totalorder %s18, 1
      %p104 = por %p102, %p103
      %p105 = scmp.ne.s32.totalorder %s96, %s97
      %p106 = scmp.eq.s32.totalorder %s18, 0
      %p107 = por %p105, %p106
      %p108 = scmp.ne.s32.totalorder %s96, %s97
      %p109 = scmp.eq.s32.totalorder %s19, 1
      %p110 = por %p108, %p109
      %p112 = scmp.ne.s32.totalorder %s97, %s111
      %p113 = scmp.eq.s32.totalorder %s19, 0
      %p114 = por %p112, %p113
      %s116 = sadd.s32 %s115, 1
      %p119 = scmp.eq.s32.totalorder %s13, 1
      %p120 = scmp.ne.s32.totalorder %s115, %s117
      %p121 = scmp.eq.s32.totalorder %s13, 0
      %p122 = por %p120, %p121
      %p123 = scmp.ne.s32.totalorder %s115, %s117
      %p124 = scmp.eq.s32.totalorder %s18, 1
      %p125 = por %p123, %p124
      %p126 = scmp.ne.s32.totalorder %s117, %s118
      %p127 = scmp.eq.s32.totalorder %s18, 0
      %p128 = por %p126, %p127
      %p129 = scmp.ne.s32.totalorder %s117, %s118
      %p130 = scmp.eq.s32.totalorder %s19, 1
      %p131 = por %p129, %p130
      %p133 = scmp.ne.s32.totalorder %s118, %s132
      %p134 = scmp.eq.s32.totalorder %s19, 0
      %p135 = por %p133, %p134
      %s137 = sadd.s32 %s136, 1
      %p140 = scmp.eq.s32.totalorder %s13, 1
      %p141 = scmp.ne.s32.totalorder %s136, %s138
      %p142 = scmp.eq.s32.totalorder %s13, 0
      %p143 = por %p141, %p142
      %p144 = scmp.ne.s32.totalorder %s136, %s138
      %p145 = scmp.eq.s32.totalorder %s18, 1
      %p146 = por %p144, %p145
      %p147 = scmp.ne.s32.totalorder %s138, %s139
      %p148 = scmp.eq.s32.totalorder %s18, 0
      %p149 = por %p147, %p148
      %p150 = scmp.ne.s32.totalorder %s138, %s139
      %p151 = scmp.eq.s32.totalorder %s19, 1
      %p152 = por %p150, %p151
      %p154 = scmp.ne.s32.totalorder %s139, %s153
      %p155 = scmp.eq.s32.totalorder %s19, 0
      %p156 = por %p154, %p155
      %s158 = sadd.s32 %s157, 1
      %p161 = scmp.eq.s32.totalorder %s13, 1
      %p162 = scmp.ne.s32.totalorder %s157, %s159
      %p163 = scmp.eq.s32.totalorder %s13, 0
      %p164 = por %p162, %p163
      %p165 = scmp.ne.s32.totalorder %s157, %s159
      %p166 = scmp.eq.s32.totalorder %s18, 1
      %p167 = por %p165, %p166
      %p168 = scmp.ne.s32.totalorder %s159, %s160
      %p169 = scmp.eq.s32.totalorder %s18, 0
      %p170 = por %p168, %p169
      %p171 = scmp.ne.s32.totalorder %s159, %s160
      %p172 = scmp.eq.s32.totalorder %s19, 1
      %p173 = por %p171, %p172
      %p175 = scmp.ne.s32.totalorder %s160, %s174
      %p176 = scmp.eq.s32.totalorder %s19, 0
      %p177 = por %p175, %p176
      %s178 = ssub.s32 %s13, %s20
      %p179 = scmp.eq.s32.totalorder %s178, 0
      %s181 = sadd.s32 %s180, 1
      %s182 = scalar_select %p179, %s180, %s181
      %p185 = pneg %p179
      %p186 = scmp.eq.s32.totalorder %s13, 1
      %p187 = por %p185, %p186
      %p188 = scmp.ne.s32.totalorder %s180, %s183
      %p189 = scmp.eq.s32.totalorder %s13, 0
      %p190 = por %p188, %p189
      %p191 = scmp.ne.s32.totalorder %s180, %s183
      %p192 = scmp.eq.s32.totalorder %s18, 1
      %p193 = por %p191, %p192
      %p194 = scmp.ne.s32.totalorder %s183, %s184
      %p195 = scmp.eq.s32.totalorder %s18, 0
      %p196 = por %p194, %p195
      %p197 = scmp.ne.s32.totalorder %s183, %s184
      %p198 = scmp.eq.s32.totalorder %s19, 1
      %p199 = por %p197, %p198
      %p201 = scmp.ne.s32.totalorder %s184, %s200
      %p202 = scmp.eq.s32.totalorder %s19, 0
      %p203 = por %p201, %p202
      %p204 = scmp.le.s32.totalorder 1, %s13
      %p205 = scmp.lt.s32.totalorder %s13, 3
      %p206 = pnand %p204, %p205
      %p207 = pneg %p206
      // Predicated region
      $region9: #{efficient_mha.3} parent=5 // pred_check
        _
      $region10: #{efficient_mha.3} parent=5 // pred_check_branch
        %209 = sbr.rel (%p206) target = $region12
      $region11: #{efficient_mha.3} parent=5 // pred_region
        %s210 = ssub.s32 %s13, 1
        // Predicated region
        $region13: #{efficient_mha.3} parent=11 // pred_check
          %p211 = pneg %p86
        $region14: #{efficient_mha.3} parent=11 // pred_check_branch
          %213 = sbr.rel (%p211) target = $region16
        $region15: #{efficient_mha.3} parent=11 // pred_region
          _
        $region16: #{efficient_mha.3} parent=11 // pred_fallthru
          _
        // Predicated region
        $region17: #{efficient_mha.3} parent=11 // pred_check
          %p214 = pneg %p107
        $region18: #{efficient_mha.3} parent=11 // pred_check_branch
          %216 = sbr.rel (%p214) target = $region20
        $region19: #{efficient_mha.3} parent=11 // pred_region
          _
        $region20: #{efficient_mha.3} parent=11 // pred_fallthru
          _
        // Predicated region
        $region21: #{efficient_mha.3} parent=11 // pred_check
          %p217 = pneg %p128
        $region22: #{efficient_mha.3} parent=11 // pred_check_branch
          %219 = sbr.rel (%p217) target = $region24
        $region23: #{efficient_mha.3} parent=11 // pred_region
          _
        $region24: #{efficient_mha.3} parent=11 // pred_fallthru
          _
        // Predicated region
        $region25: #{efficient_mha.3} parent=11 // pred_check
          %p220 = pneg %p149
        $region26: #{efficient_mha.3} parent=11 // pred_check_branch
          %222 = sbr.rel (%p220) target = $region28
        $region27: #{efficient_mha.3} parent=11 // pred_region
          _
        $region28: #{efficient_mha.3} parent=11 // pred_fallthru
          _
        // Predicated region
        $region29: #{efficient_mha.3} parent=11 // pred_check
          %p223 = pneg %p170
        $region30: #{efficient_mha.3} parent=11 // pred_check_branch
          %225 = sbr.rel (%p223) target = $region32
        $region31: #{efficient_mha.3} parent=11 // pred_region
          _
        $region32: #{efficient_mha.3} parent=11 // pred_fallthru
          _
      $region12: #{efficient_mha.3} parent=5 // pred_fallthru
        _
      %p226 = scmp.lt.s32.totalorder %s13, 2
      // Predicated region
      $region33: #{efficient_mha.3} parent=5 // pred_check
        %p227 = pneg %p226
      $region34: #{efficient_mha.3} parent=5 // pred_check_branch
        %229 = sbr.rel (%p227) target = $region36
      $region35: #{efficient_mha.3} parent=5 // pred_region
        // Predicated region
        $region37: #{efficient_mha.3} parent=35 // pred_check
          %p230 = pneg %p33
        $region38: #{efficient_mha.3} parent=35 // pred_check_branch
          %232 = sbr.rel (%p230) target = $region40
        $region39: #{efficient_mha.3} parent=35 // pred_region
          %s233 = sand.u32 %s23, 1
          %s234 = sand.u32 %s23, 1
          %s235 = smul.addr %s234, 32
          %s236 = scalar_lea.vmem [#allocation2], %s235
          %s237 = smul.addr %s13, 8
          %s238 = scalar_lea.vmem %s0, %s237
          // Predicated region
          $region41: #{efficient_mha.3} parent=39 // pred_check
            _
          $region42: #{efficient_mha.3} parent=39 // pred_check_branch
            %240 = sbr.rel (0) target = $region44
          $region43: #{efficient_mha.3} parent=39 // pred_region
            // Predicated region
            $region45: #{efficient_mha.3} parent=43 // pred_check
              _
            $region46: #{efficient_mha.3} parent=43 // pred_check_branch
              %242 = sbr.rel (0) target = $region48
            $region47: #{efficient_mha.3} parent=43 // pred_region
              // Predicated region
              $region60: #{efficient_mha.3} parent=47 // pred_check
                _
              $region61: #{efficient_mha.3} parent=47 // pred_check_branch
                %264 = sbr.rel (0) target = $region63
              $region62: #{efficient_mha.3} parent=47 // pred_region
                loop: start=0, step=1, limit=1
                $region64: #{efficient_mha.3} parent=62 // loop_pre_header
                  _
                $region65: #{efficient_mha.3} parent=62 // loop_header
                  %s266 = sphi 0, %s270
                  %p267 = scmp.ge.s32.totalorder %s266, 1
                  %s271 = sphi %s238, %s238
                  %s272 = sphi %s236, %s236
                $region66: #{efficient_mha.3} parent=62 // loop_header_branch
                  %269 = sbr.rel (%p267) target = $region70
                $region67: #{efficient_mha.3} parent=62 // loop_body
                  %v273 = vld [vmem:[%s271] sm:$0xff]
                  %274 = vst [vmem:[%s272] sm:$0xff] %v273
                  %v275 = vld [vmem:[%s271 + $0x10] sm:$0xff]
                  %276 = vst [vmem:[%s272 + $0x8] sm:$0xff] %v275
                  %v277 = vld [vmem:[%s271 + $0x20] sm:$0xff]
                  %278 = vst [vmem:[%s272 + $0x10] sm:$0xff] %v277
                  %v279 = vld [vmem:[%s271 + $0x30] sm:$0xff]
                  %280 = vst [vmem:[%s272 + $0x18] sm:$0xff] %v279
                $region68: #{efficient_mha.3} parent=62 // loop_footer
                  %s270 = sadd.s32 1, %s266
                $region69: #{efficient_mha.3} parent=62 // loop_footer_branch
                  %265 = sbr.rel target = $region65
                $region70: #{efficient_mha.3} parent=62 // loop_exit
                  _
              $region63: #{efficient_mha.3} parent=47 // pred_fallthru
                _
              // Predicated region
              $region71: #{efficient_mha.3} parent=47 // pred_check
                _
              $region72: #{efficient_mha.3} parent=47 // pred_check_branch
                %282 = sbr.rel target = $region74
              $region73: #{efficient_mha.3} parent=47 // pred_region
                _
              $region74: #{efficient_mha.3} parent=47 // pred_fallthru
                _
            $region48: #{efficient_mha.3} parent=43 // pred_fallthru
              _
            // Predicated region
            $region49: #{efficient_mha.3} parent=43 // pred_check
              _
            $region50: #{efficient_mha.3} parent=43 // pred_check_branch
              %244 = sbr.rel target = $region52
            $region51: #{efficient_mha.3} parent=43 // pred_region
              %s246 = ssub.s32 256, 1
              loop: start=0, step=1, limit=1
              $region53: #{efficient_mha.3} parent=51 // loop_pre_header
                _
              $region54: #{efficient_mha.3} parent=51 // loop_header
                %s248 = sphi 0, %s252
                %p249 = scmp.ge.s32.totalorder %s248, 1
                %s253 = sphi %s238, %s238
                %s254 = sphi %s236, %s236
              $region55: #{efficient_mha.3} parent=51 // loop_header_branch
                %251 = sbr.rel (%p249) target = $region59
              $region56: #{efficient_mha.3} parent=51 // loop_body
                %v255 = vld [vmem:[%s253] sm:%s246]
                %256 = vst [vmem:[%s254] sm:%s246] %v255
                %v257 = vld [vmem:[%s253 + $0x10] sm:%s246]
                %258 = vst [vmem:[%s254 + $0x8] sm:%s246] %v257
                %v259 = vld [vmem:[%s253 + $0x20] sm:%s246]
                %260 = vst [vmem:[%s254 + $0x10] sm:%s246] %v259
                %v261 = vld [vmem:[%s253 + $0x30] sm:%s246]
                %262 = vst [vmem:[%s254 + $0x18] sm:%s246] %v261
              $region57: #{efficient_mha.3} parent=51 // loop_footer
                %s252 = sadd.s32 1, %s248
              $region58: #{efficient_mha.3} parent=51 // loop_footer_branch
                %247 = sbr.rel target = $region54
              $region59: #{efficient_mha.3} parent=51 // loop_exit
                _
            $region52: #{efficient_mha.3} parent=43 // pred_fallthru
              _
          $region44: #{efficient_mha.3} parent=39 // pred_fallthru
            _
          %283 = vnop
        $region40: #{efficient_mha.3} parent=35 // pred_fallthru
          _
        // Predicated region
        $region75: #{efficient_mha.3} parent=35 // pred_check
          %p284 = pneg %p59
        $region76: #{efficient_mha.3} parent=35 // pred_check_branch
          %286 = sbr.rel (%p284) target = $region78
        $region77: #{efficient_mha.3} parent=35 // pred_region
          %s287 = sand.u32 %s49, 1
          %s288 = sand.u32 %s49, 1
          %s289 = smul.addr %s288, 32
          %s290 = scalar_lea.vmem [#allocation3], %s289
          %s291 = smul.addr %s13, 8
          %s292 = scalar_lea.vmem %s1, %s291
          // Predicated region
          $region79: #{efficient_mha.3} parent=77 // pred_check
            _
          $region80: #{efficient_mha.3} parent=77 // pred_check_branch
            %294 = sbr.rel (0) target = $region82
          $region81: #{efficient_mha.3} parent=77 // pred_region
            // Predicated region
            $region83: #{efficient_mha.3} parent=81 // pred_check
              _
            $region84: #{efficient_mha.3} parent=81 // pred_check_branch
              %296 = sbr.rel (0) target = $region86
            $region85: #{efficient_mha.3} parent=81 // pred_region
              // Predicated region
              $region98: #{efficient_mha.3} parent=85 // pred_check
                _
              $region99: #{efficient_mha.3} parent=85 // pred_check_branch
                %318 = sbr.rel (0) target = $region101
              $region100: #{efficient_mha.3} parent=85 // pred_region
                loop: start=0, step=1, limit=1
                $region102: #{efficient_mha.3} parent=100 // loop_pre_header
                  _
                $region103: #{efficient_mha.3} parent=100 // loop_header
                  %s320 = sphi 0, %s324
                  %p321 = scmp.ge.s32.totalorder %s320, 1
                  %s325 = sphi %s292, %s292
                  %s326 = sphi %s290, %s290
                $region104: #{efficient_mha.3} parent=100 // loop_header_branch
                  %323 = sbr.rel (%p321) target = $region108
                $region105: #{efficient_mha.3} parent=100 // loop_body
                  %v327 = vld [vmem:[%s325] sm:$0xff]
                  %328 = vst [vmem:[%s326] sm:$0xff] %v327
                  %v329 = vld [vmem:[%s325 + $0x10] sm:$0xff]
                  %330 = vst [vmem:[%s326 + $0x8] sm:$0xff] %v329
                  %v331 = vld [vmem:[%s325 + $0x20] sm:$0xff]
                  %332 = vst [vmem:[%s326 + $0x10] sm:$0xff] %v331
                  %v333 = vld [vmem:[%s325 + $0x30] sm:$0xff]
                  %334 = vst [vmem:[%s326 + $0x18] sm:$0xff] %v333
                $region106: #{efficient_mha.3} parent=100 // loop_footer
                  %s324 = sadd.s32 1, %s320
                $region107: #{efficient_mha.3} parent=100 // loop_footer_branch
                  %319 = sbr.rel target = $region103
                $region108: #{efficient_mha.3} parent=100 // loop_exit
                  _
              $region101: #{efficient_mha.3} parent=85 // pred_fallthru
                _
              // Predicated region
              $region109: #{efficient_mha.3} parent=85 // pred_check
                _
              $region110: #{efficient_mha.3} parent=85 // pred_check_branch
                %336 = sbr.rel target = $region112
              $region111: #{efficient_mha.3} parent=85 // pred_region
                _
              $region112: #{efficient_mha.3} parent=85 // pred_fallthru
                _
            $region86: #{efficient_mha.3} parent=81 // pred_fallthru
              _
            // Predicated region
            $region87: #{efficient_mha.3} parent=81 // pred_check
              _
            $region88: #{efficient_mha.3} parent=81 // pred_check_branch
              %298 = sbr.rel target = $region90
            $region89: #{efficient_mha.3} parent=81 // pred_region
              %s300 = ssub.s32 256, 1
              loop: start=0, step=1, limit=1
              $region91: #{efficient_mha.3} parent=89 // loop_pre_header
                _
              $region92: #{efficient_mha.3} parent=89 // loop_header
                %s302 = sphi 0, %s306
                %p303 = scmp.ge.s32.totalorder %s302, 1
                %s307 = sphi %s292, %s292
                %s308 = sphi %s290, %s290
              $region93: #{efficient_mha.3} parent=89 // loop_header_branch
                %305 = sbr.rel (%p303) target = $region97
              $region94: #{efficient_mha.3} parent=89 // loop_body
                %v309 = vld [vmem:[%s307] sm:%s300]
                %310 = vst [vmem:[%s308] sm:%s300] %v309
                %v311 = vld [vmem:[%s307 + $0x10] sm:%s300]
                %312 = vst [vmem:[%s308 + $0x8] sm:%s300] %v311
                %v313 = vld [vmem:[%s307 + $0x20] sm:%s300]
                %314 = vst [vmem:[%s308 + $0x10] sm:%s300] %v313
                %v315 = vld [vmem:[%s307 + $0x30] sm:%s300]
                %316 = vst [vmem:[%s308 + $0x18] sm:%s300] %v315
              $region95: #{efficient_mha.3} parent=89 // loop_footer
                %s306 = sadd.s32 1, %s302
              $region96: #{efficient_mha.3} parent=89 // loop_footer_branch
                %301 = sbr.rel target = $region92
              $region97: #{efficient_mha.3} parent=89 // loop_exit
                _
            $region90: #{efficient_mha.3} parent=81 // pred_fallthru
              _
          $region82: #{efficient_mha.3} parent=77 // pred_fallthru
            _
          %337 = vnop
        $region78: #{efficient_mha.3} parent=35 // pred_fallthru
          _
      $region36: #{efficient_mha.3} parent=5 // pred_fallthru
        _
      %p338 = scmp.le.s32.totalorder 1, %s13
      %p339 = scmp.lt.s32.totalorder %s13, 3
      %p340 = pnand %p338, %p339
      %p341 = pneg %p340
      // Predicated region
      $region113: #{efficient_mha.3} parent=5 // pred_check
        _
      $region114: #{efficient_mha.3} parent=5 // pred_check_branch
        %343 = sbr.rel (%p340) target = $region116
      $region115: #{efficient_mha.3} parent=5 // pred_region
        %s344 = ssub.s32 %s13, 1
        %s345 = sand.u32 %s26, 1
        %s346 = sand.u32 %s26, 1
        %s347 = smul.addr %s346, 32
        %s348 = scalar_lea.vmem [#allocation2], %s347
        // Predicated region
        $region117: #{efficient_mha.3} parent=115 // pred_check
          %p349 = pneg %p39
        $region118: #{efficient_mha.3} parent=115 // pred_check_branch
          %351 = sbr.rel (%p349) target = $region120
        $region119: #{efficient_mha.3} parent=115 // pred_region
          _
        $region120: #{efficient_mha.3} parent=115 // pred_fallthru
          _
        %s352 = sand.u32 %s52, 1
        %s353 = sand.u32 %s52, 1
        %s354 = smul.addr %s353, 32
        %s355 = scalar_lea.vmem [#allocation3], %s354
        // Predicated region
        $region121: #{efficient_mha.3} parent=115 // pred_check
          %p356 = pneg %p65
        $region122: #{efficient_mha.3} parent=115 // pred_check_branch
          %358 = sbr.rel (%p356) target = $region124
        $region123: #{efficient_mha.3} parent=115 // pred_region
          _
        $region124: #{efficient_mha.3} parent=115 // pred_fallthru
          _
        %s359 = sand.u32 %s26, 1
        %s360 = sand.u32 %s26, 1
        %s361 = smul.addr %s360, 32
        %s362 = scalar_lea.vmem [#allocation2], %s361
        %p363 = pneg %p39
        %p364 = pneg %p36
        %s365 = sand.u32 %s52, 1
        %s366 = sand.u32 %s52, 1
        %s367 = smul.addr %s366, 32
        %s368 = scalar_lea.vmem [#allocation3], %s367
        %p369 = pneg %p65
        %p370 = pneg %p62
        %p371 = pneg %p86
        %p372 = pneg %p83
        %p373 = pneg %p107
        %p374 = pneg %p104
        %p375 = pneg %p128
        %p376 = pneg %p125
        %p377 = pneg %p149
        %p378 = pneg %p146
        %p379 = pneg %p170
        %p380 = pneg %p167
        %p381 = pneg %p196
        %p382 = pneg %p193
        %s383 = sand.u32 %s183, 1
        %s384 = sand.u32 %s183, 1
        %s385 = smul.addr %s384, 32
        %s386 = scalar_lea.vmem [#allocation4], %s385
        %v388 = vld [vmem:[%s348] sm:$0xff]
        %v389 = vld [vmem:[%s348 + $0x8] sm:$0xff]
        %v390 = vld [vmem:[%s348 + $0x10] sm:$0xff]
        %v391 = vld [vmem:[%s348 + $0x18] sm:$0xff]
        %v392 = vld [vmem:[%s355] sm:$0xff]
        %v393 = vld [vmem:[%s355 + $0x8] sm:$0xff]
        %v394 = vld [vmem:[%s355 + $0x10] sm:$0xff]
        %v395 = vld [vmem:[%s355 + $0x18] sm:$0xff]
        %v396 = vadd.f32 %v388, %v392
        %v397 = vadd.f32 %v389, %v393
        %v398 = vadd.f32 %v390, %v394
        %v399 = vadd.f32 %v391, %v395
        %v400 = vpack.c.bf16 %v397, %v396
        %v401 = vpack.c.bf16 %v399, %v398
        %v402 = vld [vmem:[%s3] sm:$0xf]
        %v403 = vld [vmem:[%s3 + $0x4] sm:$0xf]
        %v404 = vld [vmem:[%s3 + $0x8] sm:$0xf]
        %v405 = vld [vmem:[%s3 + $0xc] sm:$0xf]
        %v406 = vld [vmem:[%s4] sm:$0xff]
        %v407 = vld [vmem:[%s4 + $0x8] sm:$0xff]
        %v408 = vld [vmem:[%s4 + $0x10] sm:$0xff]
        %v409 = vld [vmem:[%s4 + $0x18] sm:$0xff]
        %411 = vset.pattern.permute.xlu0 0
        %412 = vperm.xlu0 %411, %v406
        %v413 = vpop.permute.xlu0 %412
        %416 = vset.pattern.permute.xlu0 0
        %417 = vperm.xlu0 %416, %v407
        %v418 = vpop.permute.xlu0 %417
        %421 = vset.pattern.permute.xlu0 0
        %422 = vperm.xlu0 %421, %v408
        %v423 = vpop.permute.xlu0 %422
        %426 = vset.pattern.permute.xlu0 0
        %427 = vperm.xlu0 %426, %v409
        %v428 = vpop.permute.xlu0 %427
        %v434 = vunpack.c.l.b16 %v402
        %v435 = vunpack.c.l.b16 %v403
        %v436 = vunpack.c.l.b16 %v404
        %v437 = vunpack.c.l.b16 %v405
        %v438 = vpack.c.b16 %v435, %v434
        %v439 = vpack.c.b16 %v437, %v436
        %vm440 = vcmask 261120
        %v442 = vsel %vm440, %v438, 0
        %v445 = vsel %vm440, %v439, 0
        %447 = vmatprep.subr.bf16.mxu0 0
        %448 = vmatpush1.bf16.msra.mxu0 0
        %449 = vmatprep.subr.bf16.mxu0 0
        %450 = vmatpush1.bf16.msra.mxu0 0
        %451 = vmatprep.subr.bf16.mxu0 0
        %452 = vmatpush1.bf16.msra.mxu0 0
        %453 = vmatprep.subr.bf16.mxu0 0
        %454 = vmatpush1.bf16.msra.mxu0 0
        %455 = vmatprep.subr.bf16.mxu0 0
        %456 = vmatpush1.bf16.msra.mxu0 0
        %457 = vmatprep.subr.bf16.mxu0 0
        %458 = vmatpush1.bf16.msra.mxu0 0
        %459 = vmatprep.subr.bf16.mxu0 0
        %460 = vmatpush1.bf16.msra.mxu0 %v401
        %461 = vmatprep.subr.bf16.mxu0 0
        %462 = vmatpush1.bf16.msra.mxu0 %v400
        %463 = vmatprep.subr.bf16.mxu0 0
        %464 = vmatpush2.bf16.msra.mxu0 0
        %465 = vmatprep.subr.bf16.mxu0 0
        %466 = vmatpush2.bf16.msra.mxu0 0
        %467 = vmatprep.subr.bf16.mxu0 0
        %468 = vmatpush2.bf16.msra.mxu0 0
        %469 = vmatprep.subr.bf16.mxu0 0
        %470 = vmatpush2.bf16.msra.mxu0 0
        %471 = vmatprep.subr.bf16.mxu0 0
        %472 = vmatpush2.bf16.msra.mxu0 0
        %473 = vmatprep.subr.bf16.mxu0 0
        %474 = vmatpush2.bf16.msra.mxu0 0
        %475 = vmatprep.subr.bf16.mxu0 0
        %476 = vmatpush2.bf16.msra.mxu0 0
        %477 = vmatprep.subr.bf16.mxu0 0
        %478 = vmatpush2.bf16.msra.mxu0 0
        %479 = vmatprep.mubr.bf16.mxu0 0
        %480 = vmatmul.mubr.bf16.gmra.mxu0 %v442
        %v481 = vpop.f32.mrf.mxu0
        %v482 = vadd.f32 %v413, %v481
        %v483 = vpop.f32.mrf.mxu0
        %v484 = vpop.f32.mrf.mxu0
        %v485 = vadd.f32 %v418, %v484
        %v486 = vpop.f32.mrf.mxu0
        %487 = vmatprep.mubr.bf16.mxu0 0
        %488 = vmatmul.mubr.bf16.gmra.mxu0 %v445
        %v489 = vpop.f32.mrf.mxu0
        %v490 = vadd.f32 %v423, %v489
        %v491 = vpop.f32.mrf.mxu0
        %v492 = vpop.f32.mrf.mxu0
        %v493 = vadd.f32 %v428, %v492
        %v494 = vpop.f32.mrf.mxu0
        %495 = vdwg.mxu0
        %v496 = vmul.f32 %v482, 0.35355338
        %v497 = vmul.f32 %v485, 0.35355338
        %v498 = vmul.f32 %v490, 0.35355338
        %v499 = vmul.f32 %v493, 0.35355338
        %v500 = vld [vmem:[%s2] sm:$0xff]
        %v501 = vld [vmem:[%s2 + $0x8] sm:$0xff]
        %v502 = vld [vmem:[%s2 + $0x10] sm:$0xff]
        %v503 = vld [vmem:[%s2 + $0x18] sm:$0xff]
        %v504 = vld [vmem:[%s2 + $0x20] sm:$0xff]
        %v505 = vld [vmem:[%s2 + $0x28] sm:$0xff]
        %v506 = vld [vmem:[%s2 + $0x30] sm:$0xff]
        %v507 = vld [vmem:[%s2 + $0x38] sm:$0xff]
        %508 = vxpose.xlu0.b32.start [1/16] %v496, 128
        %509 = vxpose.xlu0.b32.cont [2/16] 0.0, 128
        %510 = vxpose.xlu0.b32.cont [3/16] 0.0, 128
        %511 = vxpose.xlu0.b32.cont [4/16] 0.0, 128
        %512 = vxpose.xlu0.b32.cont [5/16] 0.0, 128
        %513 = vxpose.xlu0.b32.cont [6/16] 0.0, 128
        %514 = vxpose.xlu0.b32.cont [7/16] 0.0, 128
        %515 = vxpose.xlu0.b32.cont [8/16] 0.0, 128
        %516 = vxpose.xlu0.b32.cont [9/16] 0.0, 128
        %517 = vxpose.xlu0.b32.cont [10/16] 0.0, 128
        %518 = vxpose.xlu0.b32.cont [11/16] 0.0, 128
        %519 = vxpose.xlu0.b32.cont [12/16] 0.0, 128
        %520 = vxpose.xlu0.b32.cont [13/16] 0.0, 128
        %521 = vxpose.xlu0.b32.cont [14/16] 0.0, 128
        %522 = vxpose.xlu0.b32.cont [15/16] 0.0, 128
        %523 = vxpose.xlu0.b32.end [16/16] 0.0, 128
        %v524 = vpop.trf.xlu0
        %v525 = vpop.trf.xlu0
        %v526 = vpop.trf.xlu0
        %v527 = vpop.trf.xlu0
        %v528 = vpop.trf.xlu0
        %v529 = vpop.trf.xlu0
        %v530 = vpop.trf.xlu0
        %v531 = vpop.trf.xlu0
        %v532 = vpop.trf.xlu0
        %v533 = vpop.trf.xlu0
        %v534 = vpop.trf.xlu0
        %v535 = vpop.trf.xlu0
        %v536 = vpop.trf.xlu0
        %v537 = vpop.trf.xlu0
        %v538 = vpop.trf.xlu0
        %v539 = vpop.trf.xlu0
        %540 = vxpose.xlu0.b32.start [1/16] %v497, 128
        %541 = vxpose.xlu0.b32.cont [2/16] 0.0, 128
        %542 = vxpose.xlu0.b32.cont [3/16] 0.0, 128
        %543 = vxpose.xlu0.b32.cont [4/16] 0.0, 128
        %544 = vxpose.xlu0.b32.cont [5/16] 0.0, 128
        %545 = vxpose.xlu0.b32.cont [6/16] 0.0, 128
        %546 = vxpose.xlu0.b32.cont [7/16] 0.0, 128
        %547 = vxpose.xlu0.b32.cont [8/16] 0.0, 128
        %548 = vxpose.xlu0.b32.cont [9/16] 0.0, 128
        %549 = vxpose.xlu0.b32.cont [10/16] 0.0, 128
        %550 = vxpose.xlu0.b32.cont [11/16] 0.0, 128
        %551 = vxpose.xlu0.b32.cont [12/16] 0.0, 128
        %552 = vxpose.xlu0.b32.cont [13/16] 0.0, 128
        %553 = vxpose.xlu0.b32.cont [14/16] 0.0, 128
        %554 = vxpose.xlu0.b32.cont [15/16] 0.0, 128
        %555 = vxpose.xlu0.b32.end [16/16] 0.0, 128
        %v556 = vpop.trf.xlu0
        %v557 = vpop.trf.xlu0
        %v558 = vpop.trf.xlu0
        %v559 = vpop.trf.xlu0
        %v560 = vpop.trf.xlu0
        %v561 = vpop.trf.xlu0
        %v562 = vpop.trf.xlu0
        %v563 = vpop.trf.xlu0
        %v564 = vpop.trf.xlu0
        %v565 = vpop.trf.xlu0
        %v566 = vpop.trf.xlu0
        %v567 = vpop.trf.xlu0
        %v568 = vpop.trf.xlu0
        %v569 = vpop.trf.xlu0
        %v570 = vpop.trf.xlu0
        %v571 = vpop.trf.xlu0
        %572 = vxpose.xlu0.b32.start [1/16] %v498, 128
        %573 = vxpose.xlu0.b32.cont [2/16] 0.0, 128
        %574 = vxpose.xlu0.b32.cont [3/16] 0.0, 128
        %575 = vxpose.xlu0.b32.cont [4/16] 0.0, 128
        %576 = vxpose.xlu0.b32.cont [5/16] 0.0, 128
        %577 = vxpose.xlu0.b32.cont [6/16] 0.0, 128
        %578 = vxpose.xlu0.b32.cont [7/16] 0.0, 128
        %579 = vxpose.xlu0.b32.cont [8/16] 0.0, 128
        %580 = vxpose.xlu0.b32.cont [9/16] 0.0, 128
        %581 = vxpose.xlu0.b32.cont [10/16] 0.0, 128
        %582 = vxpose.xlu0.b32.cont [11/16] 0.0, 128
        %583 = vxpose.xlu0.b32.cont [12/16] 0.0, 128
        %584 = vxpose.xlu0.b32.cont [13/16] 0.0, 128
        %585 = vxpose.xlu0.b32.cont [14/16] 0.0, 128
        %586 = vxpose.xlu0.b32.cont [15/16] 0.0, 128
        %587 = vxpose.xlu0.b32.end [16/16] 0.0, 128
        %v588 = vpop.trf.xlu0
        %v589 = vpop.trf.xlu0
        %v590 = vpop.trf.xlu0
        %v591 = vpop.trf.xlu0
        %v592 = vpop.trf.xlu0
        %v593 = vpop.trf.xlu0
        %v594 = vpop.trf.xlu0
        %v595 = vpop.trf.xlu0
        %v596 = vpop.trf.xlu0
        %v597 = vpop.trf.xlu0
        %v598 = vpop.trf.xlu0
        %v599 = vpop.trf.xlu0
        %v600 = vpop.trf.xlu0
        %v601 = vpop.trf.xlu0
        %v602 = vpop.trf.xlu0
        %v603 = vpop.trf.xlu0
        %604 = vxpose.xlu0.b32.start [1/16] %v499, 128
        %605 = vxpose.xlu0.b32.cont [2/16] 0.0, 128
        %606 = vxpose.xlu0.b32.cont [3/16] 0.0, 128
        %607 = vxpose.xlu0.b32.cont [4/16] 0.0, 128
        %608 = vxpose.xlu0.b32.cont [5/16] 0.0, 128
        %609 = vxpose.xlu0.b32.cont [6/16] 0.0, 128
        %610 = vxpose.xlu0.b32.cont [7/16] 0.0, 128
        %611 = vxpose.xlu0.b32.cont [8/16] 0.0, 128
        %612 = vxpose.xlu0.b32.cont [9/16] 0.0, 128
        %613 = vxpose.xlu0.b32.cont [10/16] 0.0, 128
        %614 = vxpose.xlu0.b32.cont [11/16] 0.0, 128
        %615 = vxpose.xlu0.b32.cont [12/16] 0.0, 128
        %616 = vxpose.xlu0.b32.cont [13/16] 0.0, 128
        %617 = vxpose.xlu0.b32.cont [14/16] 0.0, 128
        %618 = vxpose.xlu0.b32.cont [15/16] 0.0, 128
        %619 = vxpose.xlu0.b32.end [16/16] 0.0, 128
        %v620 = vpop.trf.xlu0
        %v621 = vpop.trf.xlu0
        %v622 = vpop.trf.xlu0
        %v623 = vpop.trf.xlu0
        %v624 = vpop.trf.xlu0
        %v625 = vpop.trf.xlu0
        %v626 = vpop.trf.xlu0
        %v627 = vpop.trf.xlu0
        %v628 = vpop.trf.xlu0
        %v629 = vpop.trf.xlu0
        %v630 = vpop.trf.xlu0
        %v631 = vpop.trf.xlu0
        %v632 = vpop.trf.xlu0
        %v633 = vpop.trf.xlu0
        %v634 = vpop.trf.xlu0
        %v635 = vpop.trf.xlu0
        %v636 = vpack.c.bf16 %v525, %v524
        %v637 = vpack.c.bf16 %v527, %v526
        %v638 = vpack.c.bf16 %v529, %v528
        %v639 = vpack.c.bf16 %v531, %v530
        %v640 = vpack.c.bf16 %v533, %v532
        %v641 = vpack.c.bf16 %v535, %v534
        %v642 = vpack.c.bf16 %v537, %v536
        %v643 = vpack.c.bf16 %v539, %v538
        %v644 = vpack.c.bf16 %v557, %v556
        %v645 = vpack.c.bf16 %v559, %v558
        %v646 = vpack.c.bf16 %v561, %v560
        %v647 = vpack.c.bf16 %v563, %v562
        %v648 = vpack.c.bf16 %v565, %v564
        %v649 = vpack.c.bf16 %v567, %v566
        %v650 = vpack.c.bf16 %v569, %v568
        %v651 = vpack.c.bf16 %v571, %v570
        %v652 = vpack.c.bf16 %v589, %v588
        %v653 = vpack.c.bf16 %v591, %v590
        %v654 = vpack.c.bf16 %v593, %v592
        %v655 = vpack.c.bf16 %v595, %v594
        %v656 = vpack.c.bf16 %v597, %v596
        %v657 = vpack.c.bf16 %v599, %v598
        %v658 = vpack.c.bf16 %v601, %v600
        %v659 = vpack.c.bf16 %v603, %v602
        %v660 = vpack.c.bf16 %v621, %v620
        %v661 = vpack.c.bf16 %v623, %v622
        %v662 = vpack.c.bf16 %v625, %v624
        %v663 = vpack.c.bf16 %v627, %v626
        %v664 = vpack.c.bf16 %v629, %v628
        %v665 = vpack.c.bf16 %v631, %v630
        %v666 = vpack.c.bf16 %v633, %v632
        %v667 = vpack.c.bf16 %v635, %v634
        %v668 = vpack.c.bf16 %v500, %v500
        %v669 = vpack.c.bf16 %v501, %v501
        %v670 = vpack.c.bf16 %v502, %v502
        %v671 = vpack.c.bf16 %v503, %v503
        %v672 = vpack.c.bf16 %v504, %v504
        %v673 = vpack.c.bf16 %v505, %v505
        %v674 = vpack.c.bf16 %v506, %v506
        %v675 = vpack.c.bf16 %v507, %v507
        %vm676 = vcmask 64512
        %v678 = vsel %vm676, %v636, 0
        %v681 = vsel %vm676, %v637, 0
        %v684 = vsel %vm676, %v638, 0
        %v687 = vsel %vm676, %v639, 0
        %v690 = vsel %vm676, %v640, 0
        %v693 = vsel %vm676, %v641, 0
        %v696 = vsel %vm676, %v642, 0
        %v699 = vsel %vm676, %v643, 0
        %vm701 = vcmask 1043456
        %v703 = vsel %vm701, %v668, 0
        %705 = vmatprep.subr.bf16.mxu0 0
        %706 = vmatpush1.bf16.msra.mxu0 0
        %707 = vmatprep.subr.bf16.mxu0 0
        %708 = vmatpush1.bf16.msra.mxu0 0
        %709 = vmatprep.subr.bf16.mxu0 0
        %710 = vmatpush1.bf16.msra.mxu0 0
        %711 = vmatprep.subr.bf16.mxu0 0
        %712 = vmatpush1.bf16.msra.mxu0 0
        %713 = vmatprep.subr.bf16.mxu0 0
        %714 = vmatpush1.bf16.msra.mxu0 0
        %715 = vmatprep.subr.bf16.mxu0 0
        %716 = vmatpush1.bf16.msra.mxu0 0
        %717 = vmatprep.subr.bf16.mxu0 0
        %718 = vmatpush1.bf16.msra.mxu0 0
        %719 = vmatprep.subr.bf16.mxu0 0
        %720 = vmatpush1.bf16.msra.mxu0 %v703
        %721 = vmatprep.subr.bf16.mxu0 0
        %722 = vmatpush2.bf16.msra.mxu0 0
        %723 = vmatprep.subr.bf16.mxu0 0
        %724 = vmatpush2.bf16.msra.mxu0 0
        %725 = vmatprep.subr.bf16.mxu0 0
        %726 = vmatpush2.bf16.msra.mxu0 0
        %727 = vmatprep.subr.bf16.mxu0 0
        %728 = vmatpush2.bf16.msra.mxu0 0
        %729 = vmatprep.subr.bf16.mxu0 0
        %730 = vmatpush2.bf16.msra.mxu0 0
        %731 = vmatprep.subr.bf16.mxu0 0
        %732 = vmatpush2.bf16.msra.mxu0 0
        %733 = vmatprep.subr.bf16.mxu0 0
        %734 = vmatpush2.bf16.msra.mxu0 0
        %735 = vmatprep.subr.bf16.mxu0 0
        %736 = vmatpush2.bf16.msra.mxu0 0
        %737 = vmatprep.mubr.bf16.mxu0 0
        %738 = vmatmul.mubr.bf16.gmra.mxu0 %v678
        %v739 = vpop.f32.mrf.mxu0
        %v740 = vadd.f32 0.0, %v739
        %v741 = vpop.f32.mrf.mxu0
        %v742 = vpop.f32.mrf.mxu0
        %v743 = vadd.f32 0.0, %v742
        %v744 = vpop.f32.mrf.mxu0
        %745 = vmatprep.mubr.bf16.mxu0 0
        %746 = vmatmul.mubr.bf16.gmra.mxu0 %v681
        %v747 = vpop.f32.mrf.mxu0
        %v748 = vadd.f32 0.0, %v747
        %v749 = vpop.f32.mrf.mxu0
        %v750 = vpop.f32.mrf.mxu0
        %v751 = vadd.f32 0.0, %v750
        %v752 = vpop.f32.mrf.mxu0
        %753 = vmatprep.mubr.bf16.mxu0 0
        %754 = vmatmul.mubr.bf16.gmra.mxu0 %v684
        %v755 = vpop.f32.mrf.mxu0
        %v756 = vadd.f32 0.0, %v755
        %v757 = vpop.f32.mrf.mxu0
        %v758 = vpop.f32.mrf.mxu0
        %v759 = vadd.f32 0.0, %v758
        %v760 = vpop.f32.mrf.mxu0
        %761 = vmatprep.mubr.bf16.mxu0 0
        %762 = vmatmul.mubr.bf16.gmra.mxu0 %v687
        %v763 = vpop.f32.mrf.mxu0
        %v764 = vadd.f32 0.0, %v763
        %v765 = vpop.f32.mrf.mxu0
        %v766 = vpop.f32.mrf.mxu0
        %v767 = vadd.f32 0.0, %v766
        %v768 = vpop.f32.mrf.mxu0
        %769 = vmatprep.mubr.bf16.mxu0 0
        %770 = vmatmul.mubr.bf16.gmra.mxu0 %v690
        %v771 = vpop.f32.mrf.mxu0
        %v772 = vadd.f32 0.0, %v771
        %v773 = vpop.f32.mrf.mxu0
        %v774 = vpop.f32.mrf.mxu0
        %v775 = vadd.f32 0.0, %v774
        %v776 = vpop.f32.mrf.mxu0
        %777 = vmatprep.mubr.bf16.mxu0 0
        %778 = vmatmul.mubr.bf16.gmra.mxu0 %v693
        %v779 = vpop.f32.mrf.mxu0
        %v780 = vadd.f32 0.0, %v779
        %v781 = vpop.f32.mrf.mxu0
        %v782 = vpop.f32.mrf.mxu0
        %v783 = vadd.f32 0.0, %v782
        %v784 = vpop.f32.mrf.mxu0
        %785 = vmatprep.mubr.bf16.mxu0 0
        %786 = vmatmul.mubr.bf16.gmra.mxu0 %v696
        %v787 = vpop.f32.mrf.mxu0
        %v788 = vadd.f32 0.0, %v787
        %v789 = vpop.f32.mrf.mxu0
        %v790 = vpop.f32.mrf.mxu0
        %v791 = vadd.f32 0.0, %v790
        %v792 = vpop.f32.mrf.mxu0
        %793 = vmatprep.mubr.bf16.mxu0 0
        %794 = vmatmul.mubr.bf16.gmra.mxu0 %v699
        %v795 = vpop.f32.mrf.mxu0
        %v796 = vadd.f32 0.0, %v795
        %v797 = vpop.f32.mrf.mxu0
        %v798 = vpop.f32.mrf.mxu0
        %v799 = vadd.f32 0.0, %v798
        %v800 = vpop.f32.mrf.mxu0
        %801 = vdwg.mxu0
        %v803 = vsel %vm676, %v644, 0
        %v806 = vsel %vm676, %v645, 0
        %v809 = vsel %vm676, %v646, 0
        %v812 = vsel %vm676, %v647, 0
        %v815 = vsel %vm676, %v648, 0
        %v818 = vsel %vm676, %v649, 0
        %v821 = vsel %vm676, %v650, 0
        %v824 = vsel %vm676, %v651, 0
        %v827 = vsel %vm701, %v669, 0
        %829 = vmatprep.subr.bf16.mxu0 0
        %830 = vmatpush1.bf16.msra.mxu0 0
        %831 = vmatprep.subr.bf16.mxu0 0
        %832 = vmatpush1.bf16.msra.mxu0 0
        %833 = vmatprep.subr.bf16.mxu0 0
        %834 = vmatpush1.bf16.msra.mxu0 0
        %835 = vmatprep.subr.bf16.mxu0 0
        %836 = vmatpush1.bf16.msra.mxu0 0
        %837 = vmatprep.subr.bf16.mxu0 0
        %838 = vmatpush1.bf16.msra.mxu0 0
        %839 = vmatprep.subr.bf16.mxu0 0
        %840 = vmatpush1.bf16.msra.mxu0 0
        %841 = vmatprep.subr.bf16.mxu0 0
        %842 = vmatpush1.bf16.msra.mxu0 0
        %843 = vmatprep.subr.bf16.mxu0 0
        %844 = vmatpush1.bf16.msra.mxu0 %v827
        %845 = vmatprep.subr.bf16.mxu0 0
        %846 = vmatpush2.bf16.msra.mxu0 0
        %847 = vmatprep.subr.bf16.mxu0 0
        %848 = vmatpush2.bf16.msra.mxu0 0
        %849 = vmatprep.subr.bf16.mxu0 0
        %850 = vmatpush2.bf16.msra.mxu0 0
        %851 = vmatprep.subr.bf16.mxu0 0
        %852 = vmatpush2.bf16.msra.mxu0 0
        %853 = vmatprep.subr.bf16.mxu0 0
        %854 = vmatpush2.bf16.msra.mxu0 0
        %855 = vmatprep.subr.bf16.mxu0 0
        %856 = vmatpush2.bf16.msra.mxu0 0
        %857 = vmatprep.subr.bf16.mxu0 0
        %858 = vmatpush2.bf16.msra.mxu0 0
        %859 = vmatprep.subr.bf16.mxu0 0
        %860 = vmatpush2.bf16.msra.mxu0 0
        %861 = vmatprep.mubr.bf16.mxu0 0
        %862 = vmatmul.mubr.bf16.gmra.mxu0 %v803
        %v863 = vpop.f32.mrf.mxu0
        %v864 = vadd.f32 0.0, %v863
        %v865 = vpop.f32.mrf.mxu0
        %v866 = vpop.f32.mrf.mxu0
        %v867 = vadd.f32 0.0, %v866
        %v868 = vpop.f32.mrf.mxu0
        %869 = vmatprep.mubr.bf16.mxu0 0
        %870 = vmatmul.mubr.bf16.gmra.mxu0 %v806
        %v871 = vpop.f32.mrf.mxu0
        %v872 = vadd.f32 0.0, %v871
        %v873 = vpop.f32.mrf.mxu0
        %v874 = vpop.f32.mrf.mxu0
        %v875 = vadd.f32 0.0, %v874
        %v876 = vpop.f32.mrf.mxu0
        %877 = vmatprep.mubr.bf16.mxu0 0
        %878 = vmatmul.mubr.bf16.gmra.mxu0 %v809
        %v879 = vpop.f32.mrf.mxu0
        %v880 = vadd.f32 0.0, %v879
        %v881 = vpop.f32.mrf.mxu0
        %v882 = vpop.f32.mrf.mxu0
        %v883 = vadd.f32 0.0, %v882
        %v884 = vpop.f32.mrf.mxu0
        %885 = vmatprep.mubr.bf16.mxu0 0
        %886 = vmatmul.mubr.bf16.gmra.mxu0 %v812
        %v887 = vpop.f32.mrf.mxu0
        %v888 = vadd.f32 0.0, %v887
        %v889 = vpop.f32.mrf.mxu0
        %v890 = vpop.f32.mrf.mxu0
        %v891 = vadd.f32 0.0, %v890
        %v892 = vpop.f32.mrf.mxu0
        %893 = vmatprep.mubr.bf16.mxu0 0
        %894 = vmatmul.mubr.bf16.gmra.mxu0 %v815
        %v895 = vpop.f32.mrf.mxu0
        %v896 = vadd.f32 0.0, %v895
        %v897 = vpop.f32.mrf.mxu0
        %v898 = vpop.f32.mrf.mxu0
        %v899 = vadd.f32 0.0, %v898
        %v900 = vpop.f32.mrf.mxu0
        %901 = vmatprep.mubr.bf16.mxu0 0
        %902 = vmatmul.mubr.bf16.gmra.mxu0 %v818
        %v903 = vpop.f32.mrf.mxu0
        %v904 = vadd.f32 0.0, %v903
        %v905 = vpop.f32.mrf.mxu0
        %v906 = vpop.f32.mrf.mxu0
        %v907 = vadd.f32 0.0, %v906
        %v908 = vpop.f32.mrf.mxu0
        %909 = vmatprep.mubr.bf16.mxu0 0
        %910 = vmatmul.mubr.bf16.gmra.mxu0 %v821
        %v911 = vpop.f32.mrf.mxu0
        %v912 = vadd.f32 0.0, %v911
        %v913 = vpop.f32.mrf.mxu0
        %v914 = vpop.f32.mrf.mxu0
        %v915 = vadd.f32 0.0, %v914
        %v916 = vpop.f32.mrf.mxu0
        %917 = vmatprep.mubr.bf16.mxu0 0
        %918 = vmatmul.mubr.bf16.gmra.mxu0 %v824
        %v919 = vpop.f32.mrf.mxu0
        %v920 = vadd.f32 0.0, %v919
        %v921 = vpop.f32.mrf.mxu0
        %v922 = vpop.f32.mrf.mxu0
        %v923 = vadd.f32 0.0, %v922
        %v924 = vpop.f32.mrf.mxu0
        %925 = vdwg.mxu0
        %v927 = vsel %vm676, %v652, 0
        %v930 = vsel %vm676, %v653, 0
        %v933 = vsel %vm676, %v654, 0
        %v936 = vsel %vm676, %v655, 0
        %v939 = vsel %vm676, %v656, 0
        %v942 = vsel %vm676, %v657, 0
        %v945 = vsel %vm676, %v658, 0
        %v948 = vsel %vm676, %v659, 0
        %v951 = vsel %vm701, %v670, 0
        %953 = vmatprep.subr.bf16.mxu0 0
        %954 = vmatpush1.bf16.msra.mxu0 0
        %955 = vmatprep.subr.bf16.mxu0 0
        %956 = vmatpush1.bf16.msra.mxu0 0
        %957 = vmatprep.subr.bf16.mxu0 0
        %958 = vmatpush1.bf16.msra.mxu0 0
        %959 = vmatprep.subr.bf16.mxu0 0
        %960 = vmatpush1.bf16.msra.mxu0 0
        %961 = vmatprep.subr.bf16.mxu0 0
        %962 = vmatpush1.bf16.msra.mxu0 0
        %963 = vmatprep.subr.bf16.mxu0 0
        %964 = vmatpush1.bf16.msra.mxu0 0
        %965 = vmatprep.subr.bf16.mxu0 0
        %966 = vmatpush1.bf16.msra.mxu0 0
        %967 = vmatprep.subr.bf16.mxu0 0
        %968 = vmatpush1.bf16.msra.mxu0 %v951
        %969 = vmatprep.subr.bf16.mxu0 0
        %970 = vmatpush2.bf16.msra.mxu0 0
        %971 = vmatprep.subr.bf16.mxu0 0
        %972 = vmatpush2.bf16.msra.mxu0 0
        %973 = vmatprep.subr.bf16.mxu0 0
        %974 = vmatpush2.bf16.msra.mxu0 0
        %975 = vmatprep.subr.bf16.mxu0 0
        %976 = vmatpush2.bf16.msra.mxu0 0
        %977 = vmatprep.subr.bf16.mxu0 0
        %978 = vmatpush2.bf16.msra.mxu0 0
        %979 = vmatprep.subr.bf16.mxu0 0
        %980 = vmatpush2.bf16.msra.mxu0 0
        %981 = vmatprep.subr.bf16.mxu0 0
        %982 = vmatpush2.bf16.msra.mxu0 0
        %983 = vmatprep.subr.bf16.mxu0 0
        %984 = vmatpush2.bf16.msra.mxu0 0
        %985 = vmatprep.mubr.bf16.mxu0 0
        %986 = vmatmul.mubr.bf16.gmra.mxu0 %v927
        %v987 = vpop.f32.mrf.mxu0
        %v988 = vadd.f32 0.0, %v987
        %v989 = vpop.f32.mrf.mxu0
        %v990 = vpop.f32.mrf.mxu0
        %v991 = vadd.f32 0.0, %v990
        %v992 = vpop.f32.mrf.mxu0
        %993 = vmatprep.mubr.bf16.mxu0 0
        %994 = vmatmul.mubr.bf16.gmra.mxu0 %v930
        %v995 = vpop.f32.mrf.mxu0
        %v996 = vadd.f32 0.0, %v995
        %v997 = vpop.f32.mrf.mxu0
        %v998 = vpop.f32.mrf.mxu0
        %v999 = vadd.f32 0.0, %v998
        %v1000 = vpop.f32.mrf.mxu0
        %1001 = vmatprep.mubr.bf16.mxu0 0
        %1002 = vmatmul.mubr.bf16.gmra.mxu0 %v933
        %v1003 = vpop.f32.mrf.mxu0
        %v1004 = vadd.f32 0.0, %v1003
        %v1005 = vpop.f32.mrf.mxu0
        %v1006 = vpop.f32.mrf.mxu0
        %v1007 = vadd.f32 0.0, %v1006
        %v1008 = vpop.f32.mrf.mxu0
        %1009 = vmatprep.mubr.bf16.mxu0 0
        %1010 = vmatmul.mubr.bf16.gmra.mxu0 %v936
        %v1011 = vpop.f32.mrf.mxu0
        %v1012 = vadd.f32 0.0, %v1011
        %v1013 = vpop.f32.mrf.mxu0
        %v1014 = vpop.f32.mrf.mxu0
        %v1015 = vadd.f32 0.0, %v1014
        %v1016 = vpop.f32.mrf.mxu0
        %1017 = vmatprep.mubr.bf16.mxu0 0
        %1018 = vmatmul.mubr.bf16.gmra.mxu0 %v939
        %v1019 = vpop.f32.mrf.mxu0
        %v1020 = vadd.f32 0.0, %v1019
        %v1021 = vpop.f32.mrf.mxu0
        %v1022 = vpop.f32.mrf.mxu0
        %v1023 = vadd.f32 0.0, %v1022
        %v1024 = vpop.f32.mrf.mxu0
        %1025 = vmatprep.mubr.bf16.mxu0 0
        %1026 = vmatmul.mubr.bf16.gmra.mxu0 %v942
        %v1027 = vpop.f32.mrf.mxu0
        %v1028 = vadd.f32 0.0, %v1027
        %v1029 = vpop.f32.mrf.mxu0
        %v1030 = vpop.f32.mrf.mxu0
        %v1031 = vadd.f32 0.0, %v1030
        %v1032 = vpop.f32.mrf.mxu0
        %1033 = vmatprep.mubr.bf16.mxu0 0
        %1034 = vmatmul.mubr.bf16.gmra.mxu0 %v945
        %v1035 = vpop.f32.mrf.mxu0
        %v1036 = vadd.f32 0.0, %v1035
        %v1037 = vpop.f32.mrf.mxu0
        %v1038 = vpop.f32.mrf.mxu0
        %v1039 = vadd.f32 0.0, %v1038
        %v1040 = vpop.f32.mrf.mxu0
        %1041 = vmatprep.mubr.bf16.mxu0 0
        %1042 = vmatmul.mubr.bf16.gmra.mxu0 %v948
        %v1043 = vpop.f32.mrf.mxu0
        %v1044 = vadd.f32 0.0, %v1043
        %v1045 = vpop.f32.mrf.mxu0
        %v1046 = vpop.f32.mrf.mxu0
        %v1047 = vadd.f32 0.0, %v1046
        %v1048 = vpop.f32.mrf.mxu0
        %1049 = vdwg.mxu0
        %v1051 = vsel %vm676, %v660, 0
        %v1054 = vsel %vm676, %v661, 0
        %v1057 = vsel %vm676, %v662, 0
        %v1060 = vsel %vm676, %v663, 0
        %v1063 = vsel %vm676, %v664, 0
        %v1066 = vsel %vm676, %v665, 0
        %v1069 = vsel %vm676, %v666, 0
        %v1072 = vsel %vm676, %v667, 0
        %v1075 = vsel %vm701, %v671, 0
        %1077 = vmatprep.subr.bf16.mxu0 0
        %1078 = vmatpush1.bf16.msra.mxu0 0
        %1079 = vmatprep.subr.bf16.mxu0 0
        %1080 = vmatpush1.bf16.msra.mxu0 0
        %1081 = vmatprep.subr.bf16.mxu0 0
        %1082 = vmatpush1.bf16.msra.mxu0 0
        %1083 = vmatprep.subr.bf16.mxu0 0
        %1084 = vmatpush1.bf16.msra.mxu0 0
        %1085 = vmatprep.subr.bf16.mxu0 0
        %1086 = vmatpush1.bf16.msra.mxu0 0
        %1087 = vmatprep.subr.bf16.mxu0 0
        %1088 = vmatpush1.bf16.msra.mxu0 0
        %1089 = vmatprep.subr.bf16.mxu0 0
        %1090 = vmatpush1.bf16.msra.mxu0 0
        %1091 = vmatprep.subr.bf16.mxu0 0
        %1092 = vmatpush1.bf16.msra.mxu0 %v1075
        %1093 = vmatprep.subr.bf16.mxu0 0
        %1094 = vmatpush2.bf16.msra.mxu0 0
        %1095 = vmatprep.subr.bf16.mxu0 0
        %1096 = vmatpush2.bf16.msra.mxu0 0
        %1097 = vmatprep.subr.bf16.mxu0 0
        %1098 = vmatpush2.bf16.msra.mxu0 0
        %1099 = vmatprep.subr.bf16.mxu0 0
        %1100 = vmatpush2.bf16.msra.mxu0 0
        %1101 = vmatprep.subr.bf16.mxu0 0
        %1102 = vmatpush2.bf16.msra.mxu0 0
        %1103 = vmatprep.subr.bf16.mxu0 0
        %1104 = vmatpush2.bf16.msra.mxu0 0
        %1105 = vmatprep.subr.bf16.mxu0 0
        %1106 = vmatpush2.bf16.msra.mxu0 0
        %1107 = vmatprep.subr.bf16.mxu0 0
        %1108 = vmatpush2.bf16.msra.mxu0 0
        %1109 = vmatprep.mubr.bf16.mxu0 0
        %1110 = vmatmul.mubr.bf16.gmra.mxu0 %v1051
        %v1111 = vpop.f32.mrf.mxu0
        %v1112 = vadd.f32 0.0, %v1111
        %v1113 = vpop.f32.mrf.mxu0
        %v1114 = vpop.f32.mrf.mxu0
        %v1115 = vadd.f32 0.0, %v1114
        %v1116 = vpop.f32.mrf.mxu0
        %1117 = vmatprep.mubr.bf16.mxu0 0
        %1118 = vmatmul.mubr.bf16.gmra.mxu0 %v1054
        %v1119 = vpop.f32.mrf.mxu0
        %v1120 = vadd.f32 0.0, %v1119
        %v1121 = vpop.f32.mrf.mxu0
        %v1122 = vpop.f32.mrf.mxu0
        %v1123 = vadd.f32 0.0, %v1122
        %v1124 = vpop.f32.mrf.mxu0
        %1125 = vmatprep.mubr.bf16.mxu0 0
        %1126 = vmatmul.mubr.bf16.gmra.mxu0 %v1057
        %v1127 = vpop.f32.mrf.mxu0
        %v1128 = vadd.f32 0.0, %v1127
        %v1129 = vpop.f32.mrf.mxu0
        %v1130 = vpop.f32.mrf.mxu0
        %v1131 = vadd.f32 0.0, %v1130
        %v1132 = vpop.f32.mrf.mxu0
        %1133 = vmatprep.mubr.bf16.mxu0 0
        %1134 = vmatmul.mubr.bf16.gmra.mxu0 %v1060
        %v1135 = vpop.f32.mrf.mxu0
        %v1136 = vadd.f32 0.0, %v1135
        %v1137 = vpop.f32.mrf.mxu0
        %v1138 = vpop.f32.mrf.mxu0
        %v1139 = vadd.f32 0.0, %v1138
        %v1140 = vpop.f32.mrf.mxu0
        %1141 = vmatprep.mubr.bf16.mxu0 0
        %1142 = vmatmul.mubr.bf16.gmra.mxu0 %v1063
        %v1143 = vpop.f32.mrf.mxu0
        %v1144 = vadd.f32 0.0, %v1143
        %v1145 = vpop.f32.mrf.mxu0
        %v1146 = vpop.f32.mrf.mxu0
        %v1147 = vadd.f32 0.0, %v1146
        %v1148 = vpop.f32.mrf.mxu0
        %1149 = vmatprep.mubr.bf16.mxu0 0
        %1150 = vmatmul.mubr.bf16.gmra.mxu0 %v1066
        %v1151 = vpop.f32.mrf.mxu0
        %v1152 = vadd.f32 0.0, %v1151
        %v1153 = vpop.f32.mrf.mxu0
        %v1154 = vpop.f32.mrf.mxu0
        %v1155 = vadd.f32 0.0, %v1154
        %v1156 = vpop.f32.mrf.mxu0
        %1157 = vmatprep.mubr.bf16.mxu0 0
        %1158 = vmatmul.mubr.bf16.gmra.mxu0 %v1069
        %v1159 = vpop.f32.mrf.mxu0
        %v1160 = vadd.f32 0.0, %v1159
        %v1161 = vpop.f32.mrf.mxu0
        %v1162 = vpop.f32.mrf.mxu0
        %v1163 = vadd.f32 0.0, %v1162
        %v1164 = vpop.f32.mrf.mxu0
        %1165 = vmatprep.mubr.bf16.mxu0 0
        %1166 = vmatmul.mubr.bf16.gmra.mxu0 %v1072
        %v1167 = vpop.f32.mrf.mxu0
        %v1168 = vadd.f32 0.0, %v1167
        %v1169 = vpop.f32.mrf.mxu0
        %v1170 = vpop.f32.mrf.mxu0
        %v1171 = vadd.f32 0.0, %v1170
        %v1172 = vpop.f32.mrf.mxu0
        %1173 = vdwg.mxu0
        %vm1174 = vcmask 523264
        %v1175 = vsel %vm1174, %v740, -inf
        %1176 = vmax.xlane.f32.xlu0 %v1175
        %v1177 = vpop.xlane.xlu0 %1176
        %v1178 = vsel %vm1174, %v743, -inf
        %1179 = vmax.xlane.f32.xlu0 %v1178
        %v1180 = vpop.xlane.xlu0 %1179
        %v1181 = vsel %vm1174, %v748, -inf
        %1182 = vmax.xlane.f32.xlu0 %v1181
        %v1183 = vpop.xlane.xlu0 %1182
        %v1184 = vsel %vm1174, %v751, -inf
        %1185 = vmax.xlane.f32.xlu0 %v1184
        %v1186 = vpop.xlane.xlu0 %1185
        %v1187 = vsel %vm1174, %v756, -inf
        %1188 = vmax.xlane.f32.xlu0 %v1187
        %v1189 = vpop.xlane.xlu0 %1188
        %v1190 = vsel %vm1174, %v759, -inf
        %1191 = vmax.xlane.f32.xlu0 %v1190
        %v1192 = vpop.xlane.xlu0 %1191
        %v1193 = vsel %vm1174, %v764, -inf
        %1194 = vmax.xlane.f32.xlu0 %v1193
        %v1195 = vpop.xlane.xlu0 %1194
        %v1196 = vsel %vm1174, %v767, -inf
        %1197 = vmax.xlane.f32.xlu0 %v1196
        %v1198 = vpop.xlane.xlu0 %1197
        %v1199 = vsel %vm1174, %v772, -inf
        %1200 = vmax.xlane.f32.xlu0 %v1199
        %v1201 = vpop.xlane.xlu0 %1200
        %v1202 = vsel %vm1174, %v775, -inf
        %1203 = vmax.xlane.f32.xlu0 %v1202
        %v1204 = vpop.xlane.xlu0 %1203
        %v1205 = vsel %vm1174, %v780, -inf
        %1206 = vmax.xlane.f32.xlu0 %v1205
        %v1207 = vpop.xlane.xlu0 %1206
        %v1208 = vsel %vm1174, %v783, -inf
        %1209 = vmax.xlane.f32.xlu0 %v1208
        %v1210 = vpop.xlane.xlu0 %1209
        %v1211 = vsel %vm1174, %v788, -inf
        %1212 = vmax.xlane.f32.xlu0 %v1211
        %v1213 = vpop.xlane.xlu0 %1212
        %v1214 = vsel %vm1174, %v791, -inf
        %1215 = vmax.xlane.f32.xlu0 %v1214
        %v1216 = vpop.xlane.xlu0 %1215
        %v1217 = vsel %vm1174, %v796, -inf
        %1218 = vmax.xlane.f32.xlu0 %v1217
        %v1219 = vpop.xlane.xlu0 %1218
        %v1220 = vsel %vm1174, %v799, -inf
        %1221 = vmax.xlane.f32.xlu0 %v1220
        %v1222 = vpop.xlane.xlu0 %1221
        %v1223 = vsel %vm1174, %v864, -inf
        %1224 = vmax.xlane.f32.xlu0 %v1223
        %v1225 = vpop.xlane.xlu0 %1224
        %v1226 = vsel %vm1174, %v867, -inf
        %1227 = vmax.xlane.f32.xlu0 %v1226
        %v1228 = vpop.xlane.xlu0 %1227
        %v1229 = vsel %vm1174, %v872, -inf
        %1230 = vmax.xlane.f32.xlu0 %v1229
        %v1231 = vpop.xlane.xlu0 %1230
        %v1232 = vsel %vm1174, %v875, -inf
        %1233 = vmax.xlane.f32.xlu0 %v1232
        %v1234 = vpop.xlane.xlu0 %1233
        %v1235 = vsel %vm1174, %v880, -inf
        %1236 = vmax.xlane.f32.xlu0 %v1235
        %v1237 = vpop.xlane.xlu0 %1236
        %v1238 = vsel %vm1174, %v883, -inf
        %1239 = vmax.xlane.f32.xlu0 %v1238
        %v1240 = vpop.xlane.xlu0 %1239
        %v1241 = vsel %vm1174, %v888, -inf
        %1242 = vmax.xlane.f32.xlu0 %v1241
        %v1243 = vpop.xlane.xlu0 %1242
        %v1244 = vsel %vm1174, %v891, -inf
        %1245 = vmax.xlane.f32.xlu0 %v1244
        %v1246 = vpop.xlane.xlu0 %1245
        %v1247 = vsel %vm1174, %v896, -inf
        %1248 = vmax.xlane.f32.xlu0 %v1247
        %v1249 = vpop.xlane.xlu0 %1248
        %v1250 = vsel %vm1174, %v899, -inf
        %1251 = vmax.xlane.f32.xlu0 %v1250
        %v1252 = vpop.xlane.xlu0 %1251
        %v1253 = vsel %vm1174, %v904, -inf
        %1254 = vmax.xlane.f32.xlu0 %v1253
        %v1255 = vpop.xlane.xlu0 %1254
        %v1256 = vsel %vm1174, %v907, -inf
        %1257 = vmax.xlane.f32.xlu0 %v1256
        %v1258 = vpop.xlane.xlu0 %1257
        %v1259 = vsel %vm1174, %v912, -inf
        %1260 = vmax.xlane.f32.xlu0 %v1259
        %v1261 = vpop.xlane.xlu0 %1260
        %v1262 = vsel %vm1174, %v915, -inf
        %1263 = vmax.xlane.f32.xlu0 %v1262
        %v1264 = vpop.xlane.xlu0 %1263
        %v1265 = vsel %vm1174, %v920, -inf
        %1266 = vmax.xlane.f32.xlu0 %v1265
        %v1267 = vpop.xlane.xlu0 %1266
        %v1268 = vsel %vm1174, %v923, -inf
        %1269 = vmax.xlane.f32.xlu0 %v1268
        %v1270 = vpop.xlane.xlu0 %1269
        %v1271 = vsel %vm1174, %v988, -inf
        %1272 = vmax.xlane.f32.xlu0 %v1271
        %v1273 = vpop.xlane.xlu0 %1272
        %v1274 = vsel %vm1174, %v991, -inf
        %1275 = vmax.xlane.f32.xlu0 %v1274
        %v1276 = vpop.xlane.xlu0 %1275
        %v1277 = vsel %vm1174, %v996, -inf
        %1278 = vmax.xlane.f32.xlu0 %v1277
        %v1279 = vpop.xlane.xlu0 %1278
        %v1280 = vsel %vm1174, %v999, -inf
        %1281 = vmax.xlane.f32.xlu0 %v1280
        %v1282 = vpop.xlane.xlu0 %1281
        %v1283 = vsel %vm1174, %v1004, -inf
        %1284 = vmax.xlane.f32.xlu0 %v1283
        %v1285 = vpop.xlane.xlu0 %1284
        %v1286 = vsel %vm1174, %v1007, -inf
        %1287 = vmax.xlane.f32.xlu0 %v1286
        %v1288 = vpop.xlane.xlu0 %1287
        %v1289 = vsel %vm1174, %v1012, -inf
        %1290 = vmax.xlane.f32.xlu0 %v1289
        %v1291 = vpop.xlane.xlu0 %1290
        %v1292 = vsel %vm1174, %v1015, -inf
        %1293 = vmax.xlane.f32.xlu0 %v1292
        %v1294 = vpop.xlane.xlu0 %1293
        %v1295 = vsel %vm1174, %v1020, -inf
        %1296 = vmax.xlane.f32.xlu0 %v1295
        %v1297 = vpop.xlane.xlu0 %1296
        %v1298 = vsel %vm1174, %v1023, -inf
        %1299 = vmax.xlane.f32.xlu0 %v1298
        %v1300 = vpop.xlane.xlu0 %1299
        %v1301 = vsel %vm1174, %v1028, -inf
        %1302 = vmax.xlane.f32.xlu0 %v1301
        %v1303 = vpop.xlane.xlu0 %1302
        %v1304 = vsel %vm1174, %v1031, -inf
        %1305 = vmax.xlane.f32.xlu0 %v1304
        %v1306 = vpop.xlane.xlu0 %1305
        %v1307 = vsel %vm1174, %v1036, -inf
        %1308 = vmax.xlane.f32.xlu0 %v1307
        %v1309 = vpop.xlane.xlu0 %1308
        %v1310 = vsel %vm1174, %v1039, -inf
        %1311 = vmax.xlane.f32.xlu0 %v1310
        %v1312 = vpop.xlane.xlu0 %1311
        %v1313 = vsel %vm1174, %v1044, -inf
        %1314 = vmax.xlane.f32.xlu0 %v1313
        %v1315 = vpop.xlane.xlu0 %1314
        %v1316 = vsel %vm1174, %v1047, -inf
        %1317 = vmax.xlane.f32.xlu0 %v1316
        %v1318 = vpop.xlane.xlu0 %1317
        %v1319 = vsel %vm1174, %v1112, -inf
        %1320 = vmax.xlane.f32.xlu0 %v1319
        %v1321 = vpop.xlane.xlu0 %1320
        %v1322 = vsel %vm1174, %v1115, -inf
        %1323 = vmax.xlane.f32.xlu0 %v1322
        %v1324 = vpop.xlane.xlu0 %1323
        %v1325 = vsel %vm1174, %v1120, -inf
        %1326 = vmax.xlane.f32.xlu0 %v1325
        %v1327 = vpop.xlane.xlu0 %1326
        %v1328 = vsel %vm1174, %v1123, -inf
        %1329 = vmax.xlane.f32.xlu0 %v1328
        %v1330 = vpop.xlane.xlu0 %1329
        %v1331 = vsel %vm1174, %v1128, -inf
        %1332 = vmax.xlane.f32.xlu0 %v1331
        %v1333 = vpop.xlane.xlu0 %1332
        %v1334 = vsel %vm1174, %v1131, -inf
        %1335 = vmax.xlane.f32.xlu0 %v1334
        %v1336 = vpop.xlane.xlu0 %1335
        %v1337 = vsel %vm1174, %v1136, -inf
        %1338 = vmax.xlane.f32.xlu0 %v1337
        %v1339 = vpop.xlane.xlu0 %1338
        %v1340 = vsel %vm1174, %v1139, -inf
        %1341 = vmax.xlane.f32.xlu0 %v1340
        %v1342 = vpop.xlane.xlu0 %1341
        %v1343 = vsel %vm1174, %v1144, -inf
        %1344 = vmax.xlane.f32.xlu0 %v1343
        %v1345 = vpop.xlane.xlu0 %1344
        %v1346 = vsel %vm1174, %v1147, -inf
        %1347 = vmax.xlane.f32.xlu0 %v1346
        %v1348 = vpop.xlane.xlu0 %1347
        %v1349 = vsel %vm1174, %v1152, -inf
        %1350 = vmax.xlane.f32.xlu0 %v1349
        %v1351 = vpop.xlane.xlu0 %1350
        %v1352 = vsel %vm1174, %v1155, -inf
        %1353 = vmax.xlane.f32.xlu0 %v1352
        %v1354 = vpop.xlane.xlu0 %1353
        %v1355 = vsel %vm1174, %v1160, -inf
        %1356 = vmax.xlane.f32.xlu0 %v1355
        %v1357 = vpop.xlane.xlu0 %1356
        %v1358 = vsel %vm1174, %v1163, -inf
        %1359 = vmax.xlane.f32.xlu0 %v1358
        %v1360 = vpop.xlane.xlu0 %1359
        %v1361 = vsel %vm1174, %v1168, -inf
        %1362 = vmax.xlane.f32.xlu0 %v1361
        %v1363 = vpop.xlane.xlu0 %1362
        %v1364 = vsel %vm1174, %v1171, -inf
        %1365 = vmax.xlane.f32.xlu0 %v1364
        %v1366 = vpop.xlane.xlu0 %1365
        %v1367 = vsub.f32 %v740, %v1177
        %v1368 = vsub.f32 %v743, %v1180
        %v1369 = vsub.f32 %v748, %v1183
        %v1370 = vsub.f32 %v751, %v1186
        %v1371 = vsub.f32 %v756, %v1189
        %v1372 = vsub.f32 %v759, %v1192
        %v1373 = vsub.f32 %v764, %v1195
        %v1374 = vsub.f32 %v767, %v1198
        %v1375 = vsub.f32 %v772, %v1201
        %v1376 = vsub.f32 %v775, %v1204
        %v1377 = vsub.f32 %v780, %v1207
        %v1378 = vsub.f32 %v783, %v1210
        %v1379 = vsub.f32 %v788, %v1213
        %v1380 = vsub.f32 %v791, %v1216
        %v1381 = vsub.f32 %v796, %v1219
        %v1382 = vsub.f32 %v799, %v1222
        %v1383 = vsub.f32 %v864, %v1225
        %v1384 = vsub.f32 %v867, %v1228
        %v1385 = vsub.f32 %v872, %v1231
        %v1386 = vsub.f32 %v875, %v1234
        %v1387 = vsub.f32 %v880, %v1237
        %v1388 = vsub.f32 %v883, %v1240
        %v1389 = vsub.f32 %v888, %v1243
        %v1390 = vsub.f32 %v891, %v1246
        %v1391 = vsub.f32 %v896, %v1249
        %v1392 = vsub.f32 %v899, %v1252
        %v1393 = vsub.f32 %v904, %v1255
        %v1394 = vsub.f32 %v907, %v1258
        %v1395 = vsub.f32 %v912, %v1261
        %v1396 = vsub.f32 %v915, %v1264
        %v1397 = vsub.f32 %v920, %v1267
        %v1398 = vsub.f32 %v923, %v1270
        %v1399 = vsub.f32 %v988, %v1273
        %v1400 = vsub.f32 %v991, %v1276
        %v1401 = vsub.f32 %v996, %v1279
        %v1402 = vsub.f32 %v999, %v1282
        %v1403 = vsub.f32 %v1004, %v1285
        %v1404 = vsub.f32 %v1007, %v1288
        %v1405 = vsub.f32 %v1012, %v1291
        %v1406 = vsub.f32 %v1015, %v1294
        %v1407 = vsub.f32 %v1020, %v1297
        %v1408 = vsub.f32 %v1023, %v1300
        %v1409 = vsub.f32 %v1028, %v1303
        %v1410 = vsub.f32 %v1031, %v1306
        %v1411 = vsub.f32 %v1036, %v1309
        %v1412 = vsub.f32 %v1039, %v1312
        %v1413 = vsub.f32 %v1044, %v1315
        %v1414 = vsub.f32 %v1047, %v1318
        %v1415 = vsub.f32 %v1112, %v1321
        %v1416 = vsub.f32 %v1115, %v1324
        %v1417 = vsub.f32 %v1120, %v1327
        %v1418 = vsub.f32 %v1123, %v1330
        %v1419 = vsub.f32 %v1128, %v1333
        %v1420 = vsub.f32 %v1131, %v1336
        %v1421 = vsub.f32 %v1136, %v1339
        %v1422 = vsub.f32 %v1139, %v1342
        %v1423 = vsub.f32 %v1144, %v1345
        %v1424 = vsub.f32 %v1147, %v1348
        %v1425 = vsub.f32 %v1152, %v1351
        %v1426 = vsub.f32 %v1155, %v1354
        %v1427 = vsub.f32 %v1160, %v1357
        %v1428 = vsub.f32 %v1163, %v1360
        %v1429 = vsub.f32 %v1168, %v1363
        %v1430 = vsub.f32 %v1171, %v1366
        %v1431 = vmul.f32 %v1367, 1.442695
        %v1432 = vpow.pop %v1431
        %v1433 = vmul.f32 %v1368, 1.442695
        %v1434 = vpow.pop %v1433
        %v1435 = vmul.f32 %v1369, 1.442695
        %v1436 = vpow.pop %v1435
        %v1437 = vmul.f32 %v1370, 1.442695
        %v1438 = vpow.pop %v1437
        %v1439 = vmul.f32 %v1371, 1.442695
        %v1440 = vpow.pop %v1439
        %v1441 = vmul.f32 %v1372, 1.442695
        %v1442 = vpow.pop %v1441
        %v1443 = vmul.f32 %v1373, 1.442695
        %v1444 = vpow.pop %v1443
        %v1445 = vmul.f32 %v1374, 1.442695
        %v1446 = vpow.pop %v1445
        %v1447 = vmul.f32 %v1375, 1.442695
        %v1448 = vpow.pop %v1447
        %v1449 = vmul.f32 %v1376, 1.442695
        %v1450 = vpow.pop %v1449
        %v1451 = vmul.f32 %v1377, 1.442695
        %v1452 = vpow.pop %v1451
        %v1453 = vmul.f32 %v1378, 1.442695
        %v1454 = vpow.pop %v1453
        %v1455 = vmul.f32 %v1379, 1.442695
        %v1456 = vpow.pop %v1455
        %v1457 = vmul.f32 %v1380, 1.442695
        %v1458 = vpow.pop %v1457
        %v1459 = vmul.f32 %v1381, 1.442695
        %v1460 = vpow.pop %v1459
        %v1461 = vmul.f32 %v1382, 1.442695
        %v1462 = vpow.pop %v1461
        %v1463 = vmul.f32 %v1383, 1.442695
        %v1464 = vpow.pop %v1463
        %v1465 = vmul.f32 %v1384, 1.442695
        %v1466 = vpow.pop %v1465
        %v1467 = vmul.f32 %v1385, 1.442695
        %v1468 = vpow.pop %v1467
        %v1469 = vmul.f32 %v1386, 1.442695
        %v1470 = vpow.pop %v1469
        %v1471 = vmul.f32 %v1387, 1.442695
        %v1472 = vpow.pop %v1471
        %v1473 = vmul.f32 %v1388, 1.442695
        %v1474 = vpow.pop %v1473
        %v1475 = vmul.f32 %v1389, 1.442695
        %v1476 = vpow.pop %v1475
        %v1477 = vmul.f32 %v1390, 1.442695
        %v1478 = vpow.pop %v1477
        %v1479 = vmul.f32 %v1391, 1.442695
        %v1480 = vpow.pop %v1479
        %v1481 = vmul.f32 %v1392, 1.442695
        %v1482 = vpow.pop %v1481
        %v1483 = vmul.f32 %v1393, 1.442695
        %v1484 = vpow.pop %v1483
        %v1485 = vmul.f32 %v1394, 1.442695
        %v1486 = vpow.pop %v1485
        %v1487 = vmul.f32 %v1395, 1.442695
        %v1488 = vpow.pop %v1487
        %v1489 = vmul.f32 %v1396, 1.442695
        %v1490 = vpow.pop %v1489
        %v1491 = vmul.f32 %v1397, 1.442695
        %v1492 = vpow.pop %v1491
        %v1493 = vmul.f32 %v1398, 1.442695
        %v1494 = vpow.pop %v1493
        %v1495 = vmul.f32 %v1399, 1.442695
        %v1496 = vpow.pop %v1495
        %v1497 = vmul.f32 %v1400, 1.442695
        %v1498 = vpow.pop %v1497
        %v1499 = vmul.f32 %v1401, 1.442695
        %v1500 = vpow.pop %v1499
        %v1501 = vmul.f32 %v1402, 1.442695
        %v1502 = vpow.pop %v1501
        %v1503 = vmul.f32 %v1403, 1.442695
        %v1504 = vpow.pop %v1503
        %v1505 = vmul.f32 %v1404, 1.442695
        %v1506 = vpow.pop %v1505
        %v1507 = vmul.f32 %v1405, 1.442695
        %v1508 = vpow.pop %v1507
        %v1509 = vmul.f32 %v1406, 1.442695
        %v1510 = vpow.pop %v1509
        %v1511 = vmul.f32 %v1407, 1.442695
        %v1512 = vpow.pop %v1511
        %v1513 = vmul.f32 %v1408, 1.442695
        %v1514 = vpow.pop %v1513
        %v1515 = vmul.f32 %v1409, 1.442695
        %v1516 = vpow.pop %v1515
        %v1517 = vmul.f32 %v1410, 1.442695
        %v1518 = vpow.pop %v1517
        %v1519 = vmul.f32 %v1411, 1.442695
        %v1520 = vpow.pop %v1519
        %v1521 = vmul.f32 %v1412, 1.442695
        %v1522 = vpow.pop %v1521
        %v1523 = vmul.f32 %v1413, 1.442695
        %v1524 = vpow.pop %v1523
        %v1525 = vmul.f32 %v1414, 1.442695
        %v1526 = vpow.pop %v1525
        %v1527 = vmul.f32 %v1415, 1.442695
        %v1528 = vpow.pop %v1527
        %v1529 = vmul.f32 %v1416, 1.442695
        %v1530 = vpow.pop %v1529
        %v1531 = vmul.f32 %v1417, 1.442695
        %v1532 = vpow.pop %v1531
        %v1533 = vmul.f32 %v1418, 1.442695
        %v1534 = vpow.pop %v1533
        %v1535 = vmul.f32 %v1419, 1.442695
        %v1536 = vpow.pop %v1535
        %v1537 = vmul.f32 %v1420, 1.442695
        %v1538 = vpow.pop %v1537
        %v1539 = vmul.f32 %v1421, 1.442695
        %v1540 = vpow.pop %v1539
        %v1541 = vmul.f32 %v1422, 1.442695
        %v1542 = vpow.pop %v1541
        %v1543 = vmul.f32 %v1423, 1.442695
        %v1544 = vpow.pop %v1543
        %v1545 = vmul.f32 %v1424, 1.442695
        %v1546 = vpow.pop %v1545
        %v1547 = vmul.f32 %v1425, 1.442695
        %v1548 = vpow.pop %v1547
        %v1549 = vmul.f32 %v1426, 1.442695
        %v1550 = vpow.pop %v1549
        %v1551 = vmul.f32 %v1427, 1.442695
        %v1552 = vpow.pop %v1551
        %v1553 = vmul.f32 %v1428, 1.442695
        %v1554 = vpow.pop %v1553
        %v1555 = vmul.f32 %v1429, 1.442695
        %v1556 = vpow.pop %v1555
        %v1557 = vmul.f32 %v1430, 1.442695
        %v1558 = vpow.pop %v1557
        %v1559 = vsel %vm1174, %v1432, 0.0
        %1560 = vadd.xlane.f32.xlu0 %v1559
        %v1561 = vpop.xlane.xlu0 %1560
        %v1562 = vsel %vm1174, %v1434, 0.0
        %1563 = vadd.xlane.f32.xlu0 %v1562
        %v1564 = vpop.xlane.xlu0 %1563
        %v1565 = vsel %vm1174, %v1436, 0.0
        %1566 = vadd.xlane.f32.xlu0 %v1565
        %v1567 = vpop.xlane.xlu0 %1566
        %v1568 = vsel %vm1174, %v1438, 0.0
        %1569 = vadd.xlane.f32.xlu0 %v1568
        %v1570 = vpop.xlane.xlu0 %1569
        %v1571 = vsel %vm1174, %v1440, 0.0
        %1572 = vadd.xlane.f32.xlu0 %v1571
        %v1573 = vpop.xlane.xlu0 %1572
        %v1574 = vsel %vm1174, %v1442, 0.0
        %1575 = vadd.xlane.f32.xlu0 %v1574
        %v1576 = vpop.xlane.xlu0 %1575
        %v1577 = vsel %vm1174, %v1444, 0.0
        %1578 = vadd.xlane.f32.xlu0 %v1577
        %v1579 = vpop.xlane.xlu0 %1578
        %v1580 = vsel %vm1174, %v1446, 0.0
        %1581 = vadd.xlane.f32.xlu0 %v1580
        %v1582 = vpop.xlane.xlu0 %1581
        %v1583 = vsel %vm1174, %v1448, 0.0
        %1584 = vadd.xlane.f32.xlu0 %v1583
        %v1585 = vpop.xlane.xlu0 %1584
        %v1586 = vsel %vm1174, %v1450, 0.0
        %1587 = vadd.xlane.f32.xlu0 %v1586
        %v1588 = vpop.xlane.xlu0 %1587
        %v1589 = vsel %vm1174, %v1452, 0.0
        %1590 = vadd.xlane.f32.xlu0 %v1589
        %v1591 = vpop.xlane.xlu0 %1590
        %v1592 = vsel %vm1174, %v1454, 0.0
        %1593 = vadd.xlane.f32.xlu0 %v1592
        %v1594 = vpop.xlane.xlu0 %1593
        %v1595 = vsel %vm1174, %v1456, 0.0
        %1596 = vadd.xlane.f32.xlu0 %v1595
        %v1597 = vpop.xlane.xlu0 %1596
        %v1598 = vsel %vm1174, %v1458, 0.0
        %1599 = vadd.xlane.f32.xlu0 %v1598
        %v1600 = vpop.xlane.xlu0 %1599
        %v1601 = vsel %vm1174, %v1460, 0.0
        %1602 = vadd.xlane.f32.xlu0 %v1601
        %v1603 = vpop.xlane.xlu0 %1602
        %v1604 = vsel %vm1174, %v1462, 0.0
        %1605 = vadd.xlane.f32.xlu0 %v1604
        %v1606 = vpop.xlane.xlu0 %1605
        %v1607 = vsel %vm1174, %v1464, 0.0
        %1608 = vadd.xlane.f32.xlu0 %v1607
        %v1609 = vpop.xlane.xlu0 %1608
        %v1610 = vsel %vm1174, %v1466, 0.0
        %1611 = vadd.xlane.f32.xlu0 %v1610
        %v1612 = vpop.xlane.xlu0 %1611
        %v1613 = vsel %vm1174, %v1468, 0.0
        %1614 = vadd.xlane.f32.xlu0 %v1613
        %v1615 = vpop.xlane.xlu0 %1614
        %v1616 = vsel %vm1174, %v1470, 0.0
        %1617 = vadd.xlane.f32.xlu0 %v1616
        %v1618 = vpop.xlane.xlu0 %1617
        %v1619 = vsel %vm1174, %v1472, 0.0
        %1620 = vadd.xlane.f32.xlu0 %v1619
        %v1621 = vpop.xlane.xlu0 %1620
        %v1622 = vsel %vm1174, %v1474, 0.0
        %1623 = vadd.xlane.f32.xlu0 %v1622
        %v1624 = vpop.xlane.xlu0 %1623
        %v1625 = vsel %vm1174, %v1476, 0.0
        %1626 = vadd.xlane.f32.xlu0 %v1625
        %v1627 = vpop.xlane.xlu0 %1626
        %v1628 = vsel %vm1174, %v1478, 0.0
        %1629 = vadd.xlane.f32.xlu0 %v1628
        %v1630 = vpop.xlane.xlu0 %1629
        %v1631 = vsel %vm1174, %v1480, 0.0
        %1632 = vadd.xlane.f32.xlu0 %v1631
        %v1633 = vpop.xlane.xlu0 %1632
        %v1634 = vsel %vm1174, %v1482, 0.0
        %1635 = vadd.xlane.f32.xlu0 %v1634
        %v1636 = vpop.xlane.xlu0 %1635
        %v1637 = vsel %vm1174, %v1484, 0.0
        %1638 = vadd.xlane.f32.xlu0 %v1637
        %v1639 = vpop.xlane.xlu0 %1638
        %v1640 = vsel %vm1174, %v1486, 0.0
        %1641 = vadd.xlane.f32.xlu0 %v1640
        %v1642 = vpop.xlane.xlu0 %1641
        %v1643 = vsel %vm1174, %v1488, 0.0
        %1644 = vadd.xlane.f32.xlu0 %v1643
        %v1645 = vpop.xlane.xlu0 %1644
        %v1646 = vsel %vm1174, %v1490, 0.0
        %1647 = vadd.xlane.f32.xlu0 %v1646
        %v1648 = vpop.xlane.xlu0 %1647
        %v1649 = vsel %vm1174, %v1492, 0.0
        %1650 = vadd.xlane.f32.xlu0 %v1649
        %v1651 = vpop.xlane.xlu0 %1650
        %v1652 = vsel %vm1174, %v1494, 0.0
        %1653 = vadd.xlane.f32.xlu0 %v1652
        %v1654 = vpop.xlane.xlu0 %1653
        %v1655 = vsel %vm1174, %v1496, 0.0
        %1656 = vadd.xlane.f32.xlu0 %v1655
        %v1657 = vpop.xlane.xlu0 %1656
        %v1658 = vsel %vm1174, %v1498, 0.0
        %1659 = vadd.xlane.f32.xlu0 %v1658
        %v1660 = vpop.xlane.xlu0 %1659
        %v1661 = vsel %vm1174, %v1500, 0.0
        %1662 = vadd.xlane.f32.xlu0 %v1661
        %v1663 = vpop.xlane.xlu0 %1662
        %v1664 = vsel %vm1174, %v1502, 0.0
        %1665 = vadd.xlane.f32.xlu0 %v1664
        %v1666 = vpop.xlane.xlu0 %1665
        %v1667 = vsel %vm1174, %v1504, 0.0
        %1668 = vadd.xlane.f32.xlu0 %v1667
        %v1669 = vpop.xlane.xlu0 %1668
        %v1670 = vsel %vm1174, %v1506, 0.0
        %1671 = vadd.xlane.f32.xlu0 %v1670
        %v1672 = vpop.xlane.xlu0 %1671
        %v1673 = vsel %vm1174, %v1508, 0.0
        %1674 = vadd.xlane.f32.xlu0 %v1673
        %v1675 = vpop.xlane.xlu0 %1674
        %v1676 = vsel %vm1174, %v1510, 0.0
        %1677 = vadd.xlane.f32.xlu0 %v1676
        %v1678 = vpop.xlane.xlu0 %1677
        %v1679 = vsel %vm1174, %v1512, 0.0
        %1680 = vadd.xlane.f32.xlu0 %v1679
        %v1681 = vpop.xlane.xlu0 %1680
        %v1682 = vsel %vm1174, %v1514, 0.0
        %1683 = vadd.xlane.f32.xlu0 %v1682
        %v1684 = vpop.xlane.xlu0 %1683
        %v1685 = vsel %vm1174, %v1516, 0.0
        %1686 = vadd.xlane.f32.xlu0 %v1685
        %v1687 = vpop.xlane.xlu0 %1686
        %v1688 = vsel %vm1174, %v1518, 0.0
        %1689 = vadd.xlane.f32.xlu0 %v1688
        %v1690 = vpop.xlane.xlu0 %1689
        %v1691 = vsel %vm1174, %v1520, 0.0
        %1692 = vadd.xlane.f32.xlu0 %v1691
        %v1693 = vpop.xlane.xlu0 %1692
        %v1694 = vsel %vm1174, %v1522, 0.0
        %1695 = vadd.xlane.f32.xlu0 %v1694
        %v1696 = vpop.xlane.xlu0 %1695
        %v1697 = vsel %vm1174, %v1524, 0.0
        %1698 = vadd.xlane.f32.xlu0 %v1697
        %v1699 = vpop.xlane.xlu0 %1698
        %v1700 = vsel %vm1174, %v1526, 0.0
        %1701 = vadd.xlane.f32.xlu0 %v1700
        %v1702 = vpop.xlane.xlu0 %1701
        %v1703 = vsel %vm1174, %v1528, 0.0
        %1704 = vadd.xlane.f32.xlu0 %v1703
        %v1705 = vpop.xlane.xlu0 %1704
        %v1706 = vsel %vm1174, %v1530, 0.0
        %1707 = vadd.xlane.f32.xlu0 %v1706
        %v1708 = vpop.xlane.xlu0 %1707
        %v1709 = vsel %vm1174, %v1532, 0.0
        %1710 = vadd.xlane.f32.xlu0 %v1709
        %v1711 = vpop.xlane.xlu0 %1710
        %v1712 = vsel %vm1174, %v1534, 0.0
        %1713 = vadd.xlane.f32.xlu0 %v1712
        %v1714 = vpop.xlane.xlu0 %1713
        %v1715 = vsel %vm1174, %v1536, 0.0
        %1716 = vadd.xlane.f32.xlu0 %v1715
        %v1717 = vpop.xlane.xlu0 %1716
        %v1718 = vsel %vm1174, %v1538, 0.0
        %1719 = vadd.xlane.f32.xlu0 %v1718
        %v1720 = vpop.xlane.xlu0 %1719
        %v1721 = vsel %vm1174, %v1540, 0.0
        %1722 = vadd.xlane.f32.xlu0 %v1721
        %v1723 = vpop.xlane.xlu0 %1722
        %v1724 = vsel %vm1174, %v1542, 0.0
        %1725 = vadd.xlane.f32.xlu0 %v1724
        %v1726 = vpop.xlane.xlu0 %1725
        %v1727 = vsel %vm1174, %v1544, 0.0
        %1728 = vadd.xlane.f32.xlu0 %v1727
        %v1729 = vpop.xlane.xlu0 %1728
        %v1730 = vsel %vm1174, %v1546, 0.0
        %1731 = vadd.xlane.f32.xlu0 %v1730
        %v1732 = vpop.xlane.xlu0 %1731
        %v1733 = vsel %vm1174, %v1548, 0.0
        %1734 = vadd.xlane.f32.xlu0 %v1733
        %v1735 = vpop.xlane.xlu0 %1734
        %v1736 = vsel %vm1174, %v1550, 0.0
        %1737 = vadd.xlane.f32.xlu0 %v1736
        %v1738 = vpop.xlane.xlu0 %1737
        %v1739 = vsel %vm1174, %v1552, 0.0
        %1740 = vadd.xlane.f32.xlu0 %v1739
        %v1741 = vpop.xlane.xlu0 %1740
        %v1742 = vsel %vm1174, %v1554, 0.0
        %1743 = vadd.xlane.f32.xlu0 %v1742
        %v1744 = vpop.xlane.xlu0 %1743
        %v1745 = vsel %vm1174, %v1556, 0.0
        %1746 = vadd.xlane.f32.xlu0 %v1745
        %v1747 = vpop.xlane.xlu0 %1746
        %v1748 = vsel %vm1174, %v1558, 0.0
        %1749 = vadd.xlane.f32.xlu0 %v1748
        %v1750 = vpop.xlane.xlu0 %1749
        %v1751 = vrcp.pop %v1561
        %v1752 = vmul.f32 %v1432, %v1751
        %v1753 = vrcp.pop %v1564
        %v1754 = vmul.f32 %v1434, %v1753
        %v1755 = vrcp.pop %v1567
        %v1756 = vmul.f32 %v1436, %v1755
        %v1757 = vrcp.pop %v1570
        %v1758 = vmul.f32 %v1438, %v1757
        %v1759 = vrcp.pop %v1573
        %v1760 = vmul.f32 %v1440, %v1759
        %v1761 = vrcp.pop %v1576
        %v1762 = vmul.f32 %v1442, %v1761
        %v1763 = vrcp.pop %v1579
        %v1764 = vmul.f32 %v1444, %v1763
        %v1765 = vrcp.pop %v1582
        %v1766 = vmul.f32 %v1446, %v1765
        %v1767 = vrcp.pop %v1585
        %v1768 = vmul.f32 %v1448, %v1767
        %v1769 = vrcp.pop %v1588
        %v1770 = vmul.f32 %v1450, %v1769
        %v1771 = vrcp.pop %v1591
        %v1772 = vmul.f32 %v1452, %v1771
        %v1773 = vrcp.pop %v1594
        %v1774 = vmul.f32 %v1454, %v1773
        %v1775 = vrcp.pop %v1597
        %v1776 = vmul.f32 %v1456, %v1775
        %v1777 = vrcp.pop %v1600
        %v1778 = vmul.f32 %v1458, %v1777
        %v1779 = vrcp.pop %v1603
        %v1780 = vmul.f32 %v1460, %v1779
        %v1781 = vrcp.pop %v1606
        %v1782 = vmul.f32 %v1462, %v1781
        %v1783 = vrcp.pop %v1609
        %v1784 = vmul.f32 %v1464, %v1783
        %v1785 = vrcp.pop %v1612
        %v1786 = vmul.f32 %v1466, %v1785
        %v1787 = vrcp.pop %v1615
        %v1788 = vmul.f32 %v1468, %v1787
        %v1789 = vrcp.pop %v1618
        %v1790 = vmul.f32 %v1470, %v1789
        %v1791 = vrcp.pop %v1621
        %v1792 = vmul.f32 %v1472, %v1791
        %v1793 = vrcp.pop %v1624
        %v1794 = vmul.f32 %v1474, %v1793
        %v1795 = vrcp.pop %v1627
        %v1796 = vmul.f32 %v1476, %v1795
        %v1797 = vrcp.pop %v1630
        %v1798 = vmul.f32 %v1478, %v1797
        %v1799 = vrcp.pop %v1633
        %v1800 = vmul.f32 %v1480, %v1799
        %v1801 = vrcp.pop %v1636
        %v1802 = vmul.f32 %v1482, %v1801
        %v1803 = vrcp.pop %v1639
        %v1804 = vmul.f32 %v1484, %v1803
        %v1805 = vrcp.pop %v1642
        %v1806 = vmul.f32 %v1486, %v1805
        %v1807 = vrcp.pop %v1645
        %v1808 = vmul.f32 %v1488, %v1807
        %v1809 = vrcp.pop %v1648
        %v1810 = vmul.f32 %v1490, %v1809
        %v1811 = vrcp.pop %v1651
        %v1812 = vmul.f32 %v1492, %v1811
        %v1813 = vrcp.pop %v1654
        %v1814 = vmul.f32 %v1494, %v1813
        %v1815 = vrcp.pop %v1657
        %v1816 = vmul.f32 %v1496, %v1815
        %v1817 = vrcp.pop %v1660
        %v1818 = vmul.f32 %v1498, %v1817
        %v1819 = vrcp.pop %v1663
        %v1820 = vmul.f32 %v1500, %v1819
        %v1821 = vrcp.pop %v1666
        %v1822 = vmul.f32 %v1502, %v1821
        %v1823 = vrcp.pop %v1669
        %v1824 = vmul.f32 %v1504, %v1823
        %v1825 = vrcp.pop %v1672
        %v1826 = vmul.f32 %v1506, %v1825
        %v1827 = vrcp.pop %v1675
        %v1828 = vmul.f32 %v1508, %v1827
        %v1829 = vrcp.pop %v1678
        %v1830 = vmul.f32 %v1510, %v1829
        %v1831 = vrcp.pop %v1681
        %v1832 = vmul.f32 %v1512, %v1831
        %v1833 = vrcp.pop %v1684
        %v1834 = vmul.f32 %v1514, %v1833
        %v1835 = vrcp.pop %v1687
        %v1836 = vmul.f32 %v1516, %v1835
        %v1837 = vrcp.pop %v1690
        %v1838 = vmul.f32 %v1518, %v1837
        %v1839 = vrcp.pop %v1693
        %v1840 = vmul.f32 %v1520, %v1839
        %v1841 = vrcp.pop %v1696
        %v1842 = vmul.f32 %v1522, %v1841
        %v1843 = vrcp.pop %v1699
        %v1844 = vmul.f32 %v1524, %v1843
        %v1845 = vrcp.pop %v1702
        %v1846 = vmul.f32 %v1526, %v1845
        %v1847 = vrcp.pop %v1705
        %v1848 = vmul.f32 %v1528, %v1847
        %v1849 = vrcp.pop %v1708
        %v1850 = vmul.f32 %v1530, %v1849
        %v1851 = vrcp.pop %v1711
        %v1852 = vmul.f32 %v1532, %v1851
        %v1853 = vrcp.pop %v1714
        %v1854 = vmul.f32 %v1534, %v1853
        %v1855 = vrcp.pop %v1717
        %v1856 = vmul.f32 %v1536, %v1855
        %v1857 = vrcp.pop %v1720
        %v1858 = vmul.f32 %v1538, %v1857
        %v1859 = vrcp.pop %v1723
        %v1860 = vmul.f32 %v1540, %v1859
        %v1861 = vrcp.pop %v1726
        %v1862 = vmul.f32 %v1542, %v1861
        %v1863 = vrcp.pop %v1729
        %v1864 = vmul.f32 %v1544, %v1863
        %v1865 = vrcp.pop %v1732
        %v1866 = vmul.f32 %v1546, %v1865
        %v1867 = vrcp.pop %v1735
        %v1868 = vmul.f32 %v1548, %v1867
        %v1869 = vrcp.pop %v1738
        %v1870 = vmul.f32 %v1550, %v1869
        %v1871 = vrcp.pop %v1741
        %v1872 = vmul.f32 %v1552, %v1871
        %v1873 = vrcp.pop %v1744
        %v1874 = vmul.f32 %v1554, %v1873
        %v1875 = vrcp.pop %v1747
        %v1876 = vmul.f32 %v1556, %v1875
        %v1877 = vrcp.pop %v1750
        %v1878 = vmul.f32 %v1558, %v1877
        %v1879 = vpack.c.bf16 %v1754, %v1752
        %v1880 = vpack.c.bf16 %v1758, %v1756
        %v1881 = vpack.c.bf16 %v1762, %v1760
        %v1882 = vpack.c.bf16 %v1766, %v1764
        %v1883 = vpack.c.bf16 %v1770, %v1768
        %v1884 = vpack.c.bf16 %v1774, %v1772
        %v1885 = vpack.c.bf16 %v1778, %v1776
        %v1886 = vpack.c.bf16 %v1782, %v1780
        %v1887 = vpack.c.bf16 %v1786, %v1784
        %v1888 = vpack.c.bf16 %v1790, %v1788
        %v1889 = vpack.c.bf16 %v1794, %v1792
        %v1890 = vpack.c.bf16 %v1798, %v1796
        %v1891 = vpack.c.bf16 %v1802, %v1800
        %v1892 = vpack.c.bf16 %v1806, %v1804
        %v1893 = vpack.c.bf16 %v1810, %v1808
        %v1894 = vpack.c.bf16 %v1814, %v1812
        %v1895 = vpack.c.bf16 %v1818, %v1816
        %v1896 = vpack.c.bf16 %v1822, %v1820
        %v1897 = vpack.c.bf16 %v1826, %v1824
        %v1898 = vpack.c.bf16 %v1830, %v1828
        %v1899 = vpack.c.bf16 %v1834, %v1832
        %v1900 = vpack.c.bf16 %v1838, %v1836
        %v1901 = vpack.c.bf16 %v1842, %v1840
        %v1902 = vpack.c.bf16 %v1846, %v1844
        %v1903 = vpack.c.bf16 %v1850, %v1848
        %v1904 = vpack.c.bf16 %v1854, %v1852
        %v1905 = vpack.c.bf16 %v1858, %v1856
        %v1906 = vpack.c.bf16 %v1862, %v1860
        %v1907 = vpack.c.bf16 %v1866, %v1864
        %v1908 = vpack.c.bf16 %v1870, %v1868
        %v1909 = vpack.c.bf16 %v1874, %v1872
        %v1910 = vpack.c.bf16 %v1878, %v1876
        %v1912 = vsel %vm1174, %v672, 0
        %v1915 = vsel %vm1174, %v1879, 0
        %v1918 = vsel %vm1174, %v1880, 0
        %v1921 = vsel %vm1174, %v1881, 0
        %v1924 = vsel %vm1174, %v1882, 0
        %v1927 = vsel %vm1174, %v1883, 0
        %v1930 = vsel %vm1174, %v1884, 0
        %v1933 = vsel %vm1174, %v1885, 0
        %v1936 = vsel %vm1174, %v1886, 0
        %1938 = vmatprep.subr.bf16.mxu0 0
        %1939 = vmatpush1.bf16.xpose.msra.mxu0 %v1936
        %1940 = vmatprep.subr.bf16.mxu0 0
        %1941 = vmatpush1.bf16.xpose.msra.mxu0 %v1933
        %1942 = vmatprep.subr.bf16.mxu0 0
        %1943 = vmatpush1.bf16.xpose.msra.mxu0 %v1930
        %1944 = vmatprep.subr.bf16.mxu0 0
        %1945 = vmatpush1.bf16.xpose.msra.mxu0 %v1927
        %1946 = vmatprep.subr.bf16.mxu0 0
        %1947 = vmatpush1.bf16.xpose.msra.mxu0 %v1924
        %1948 = vmatprep.subr.bf16.mxu0 0
        %1949 = vmatpush1.bf16.xpose.msra.mxu0 %v1921
        %1950 = vmatprep.subr.bf16.mxu0 0
        %1951 = vmatpush1.bf16.xpose.msra.mxu0 %v1918
        %1952 = vmatprep.subr.bf16.mxu0 0
        %1953 = vmatpush1.bf16.xpose.msra.mxu0 %v1915
        %1954 = vmatprep.subr.bf16.mxu0 0
        %1955 = vmatpush2.bf16.xpose.msra.mxu0 0
        %1956 = vmatprep.subr.bf16.mxu0 0
        %1957 = vmatpush2.bf16.xpose.msra.mxu0 0
        %1958 = vmatprep.subr.bf16.mxu0 0
        %1959 = vmatpush2.bf16.xpose.msra.mxu0 0
        %1960 = vmatprep.subr.bf16.mxu0 0
        %1961 = vmatpush2.bf16.xpose.msra.mxu0 0
        %1962 = vmatprep.subr.bf16.mxu0 0
        %1963 = vmatpush2.bf16.xpose.msra.mxu0 0
        %1964 = vmatprep.subr.bf16.mxu0 0
        %1965 = vmatpush2.bf16.xpose.msra.mxu0 0
        %1966 = vmatprep.subr.bf16.mxu0 0
        %1967 = vmatpush2.bf16.xpose.msra.mxu0 0
        %1968 = vmatprep.subr.bf16.mxu0 0
        %1969 = vmatpush2.bf16.xpose.msra.mxu0 0
        %1970 = vmatprep.mubr.bf16.mxu0 0
        %1971 = vmatmul.mubr.bf16.gmra.mxu0 %v1912
        %v1972 = vpop.f32.mrf.mxu0
        %v1973 = vadd.f32 0.0, %v1972
        %v1974 = vpop.f32.mrf.mxu0
        %v1975 = vpop.f32.mrf.mxu0
        %v1976 = vpop.f32.mrf.mxu0
        %1977 = vdwg.mxu0
        %v1979 = vsel %vm1174, %v673, 0
        %v1982 = vsel %vm1174, %v1887, 0
        %v1985 = vsel %vm1174, %v1888, 0
        %v1988 = vsel %vm1174, %v1889, 0
        %v1991 = vsel %vm1174, %v1890, 0
        %v1994 = vsel %vm1174, %v1891, 0
        %v1997 = vsel %vm1174, %v1892, 0
        %v2000 = vsel %vm1174, %v1893, 0
        %v2003 = vsel %vm1174, %v1894, 0
        %2005 = vmatprep.subr.bf16.mxu0 0
        %2006 = vmatpush1.bf16.xpose.msra.mxu0 %v2003
        %2007 = vmatprep.subr.bf16.mxu0 0
        %2008 = vmatpush1.bf16.xpose.msra.mxu0 %v2000
        %2009 = vmatprep.subr.bf16.mxu0 0
        %2010 = vmatpush1.bf16.xpose.msra.mxu0 %v1997
        %2011 = vmatprep.subr.bf16.mxu0 0
        %2012 = vmatpush1.bf16.xpose.msra.mxu0 %v1994
        %2013 = vmatprep.subr.bf16.mxu0 0
        %2014 = vmatpush1.bf16.xpose.msra.mxu0 %v1991
        %2015 = vmatprep.subr.bf16.mxu0 0
        %2016 = vmatpush1.bf16.xpose.msra.mxu0 %v1988
        %2017 = vmatprep.subr.bf16.mxu0 0
        %2018 = vmatpush1.bf16.xpose.msra.mxu0 %v1985
        %2019 = vmatprep.subr.bf16.mxu0 0
        %2020 = vmatpush1.bf16.xpose.msra.mxu0 %v1982
        %2021 = vmatprep.subr.bf16.mxu0 0
        %2022 = vmatpush2.bf16.xpose.msra.mxu0 0
        %2023 = vmatprep.subr.bf16.mxu0 0
        %2024 = vmatpush2.bf16.xpose.msra.mxu0 0
        %2025 = vmatprep.subr.bf16.mxu0 0
        %2026 = vmatpush2.bf16.xpose.msra.mxu0 0
        %2027 = vmatprep.subr.bf16.mxu0 0
        %2028 = vmatpush2.bf16.xpose.msra.mxu0 0
        %2029 = vmatprep.subr.bf16.mxu0 0
        %2030 = vmatpush2.bf16.xpose.msra.mxu0 0
        %2031 = vmatprep.subr.bf16.mxu0 0
        %2032 = vmatpush2.bf16.xpose.msra.mxu0 0
        %2033 = vmatprep.subr.bf16.mxu0 0
        %2034 = vmatpush2.bf16.xpose.msra.mxu0 0
        %2035 = vmatprep.subr.bf16.mxu0 0
        %2036 = vmatpush2.bf16.xpose.msra.mxu0 0
        %2037 = vmatprep.mubr.bf16.mxu0 0
        %2038 = vmatmul.mubr.bf16.gmra.mxu0 %v1979
        %v2039 = vpop.f32.mrf.mxu0
        %v2040 = vadd.f32 0.0, %v2039
        %v2041 = vpop.f32.mrf.mxu0
        %v2042 = vpop.f32.mrf.mxu0
        %v2043 = vpop.f32.mrf.mxu0
        %2044 = vdwg.mxu0
        %v2046 = vsel %vm1174, %v674, 0
        %v2049 = vsel %vm1174, %v1895, 0
        %v2052 = vsel %vm1174, %v1896, 0
        %v2055 = vsel %vm1174, %v1897, 0
        %v2058 = vsel %vm1174, %v1898, 0
        %v2061 = vsel %vm1174, %v1899, 0
        %v2064 = vsel %vm1174, %v1900, 0
        %v2067 = vsel %vm1174, %v1901, 0
        %v2070 = vsel %vm1174, %v1902, 0
        %2072 = vmatprep.subr.bf16.mxu0 0
        %2073 = vmatpush1.bf16.xpose.msra.mxu0 %v2070
        %2074 = vmatprep.subr.bf16.mxu0 0
        %2075 = vmatpush1.bf16.xpose.msra.mxu0 %v2067
        %2076 = vmatprep.subr.bf16.mxu0 0
        %2077 = vmatpush1.bf16.xpose.msra.mxu0 %v2064
        %2078 = vmatprep.subr.bf16.mxu0 0
        %2079 = vmatpush1.bf16.xpose.msra.mxu0 %v2061
        %2080 = vmatprep.subr.bf16.mxu0 0
        %2081 = vmatpush1.bf16.xpose.msra.mxu0 %v2058
        %2082 = vmatprep.subr.bf16.mxu0 0
        %2083 = vmatpush1.bf16.xpose.msra.mxu0 %v2055
        %2084 = vmatprep.subr.bf16.mxu0 0
        %2085 = vmatpush1.bf16.xpose.msra.mxu0 %v2052
        %2086 = vmatprep.subr.bf16.mxu0 0
        %2087 = vmatpush1.bf16.xpose.msra.mxu0 %v2049
        %2088 = vmatprep.subr.bf16.mxu0 0
        %2089 = vmatpush2.bf16.xpose.msra.mxu0 0
        %2090 = vmatprep.subr.bf16.mxu0 0
        %2091 = vmatpush2.bf16.xpose.msra.mxu0 0
        %2092 = vmatprep.subr.bf16.mxu0 0
        %2093 = vmatpush2.bf16.xpose.msra.mxu0 0
        %2094 = vmatprep.subr.bf16.mxu0 0
        %2095 = vmatpush2.bf16.xpose.msra.mxu0 0
        %2096 = vmatprep.subr.bf16.mxu0 0
        %2097 = vmatpush2.bf16.xpose.msra.mxu0 0
        %2098 = vmatprep.subr.bf16.mxu0 0
        %2099 = vmatpush2.bf16.xpose.msra.mxu0 0
        %2100 = vmatprep.subr.bf16.mxu0 0
        %2101 = vmatpush2.bf16.xpose.msra.mxu0 0
        %2102 = vmatprep.subr.bf16.mxu0 0
        %2103 = vmatpush2.bf16.xpose.msra.mxu0 0
        %2104 = vmatprep.mubr.bf16.mxu0 0
        %2105 = vmatmul.mubr.bf16.gmra.mxu0 %v2046
        %v2106 = vpop.f32.mrf.mxu0
        %v2107 = vadd.f32 0.0, %v2106
        %v2108 = vpop.f32.mrf.mxu0
        %v2109 = vpop.f32.mrf.mxu0
        %v2110 = vpop.f32.mrf.mxu0
        %2111 = vdwg.mxu0
        %v2113 = vsel %vm1174, %v675, 0
        %v2116 = vsel %vm1174, %v1903, 0
        %v2119 = vsel %vm1174, %v1904, 0
        %v2122 = vsel %vm1174, %v1905, 0
        %v2125 = vsel %vm1174, %v1906, 0
        %v2128 = vsel %vm1174, %v1907, 0
        %v2131 = vsel %vm1174, %v1908, 0
        %v2134 = vsel %vm1174, %v1909, 0
        %v2137 = vsel %vm1174, %v1910, 0
        %2139 = vmatprep.subr.bf16.mxu0 0
        %2140 = vmatpush1.bf16.xpose.msra.mxu0 %v2137
        %2141 = vmatprep.subr.bf16.mxu0 0
        %2142 = vmatpush1.bf16.xpose.msra.mxu0 %v2134
        %2143 = vmatprep.subr.bf16.mxu0 0
        %2144 = vmatpush1.bf16.xpose.msra.mxu0 %v2131
        %2145 = vmatprep.subr.bf16.mxu0 0
        %2146 = vmatpush1.bf16.xpose.msra.mxu0 %v2128
        %2147 = vmatprep.subr.bf16.mxu0 0
        %2148 = vmatpush1.bf16.xpose.msra.mxu0 %v2125
        %2149 = vmatprep.subr.bf16.mxu0 0
        %2150 = vmatpush1.bf16.xpose.msra.mxu0 %v2122
        %2151 = vmatprep.subr.bf16.mxu0 0
        %2152 = vmatpush1.bf16.xpose.msra.mxu0 %v2119
        %2153 = vmatprep.subr.bf16.mxu0 0
        %2154 = vmatpush1.bf16.xpose.msra.mxu0 %v2116
        %2155 = vmatprep.subr.bf16.mxu0 0
        %2156 = vmatpush2.bf16.xpose.msra.mxu0 0
        %2157 = vmatprep.subr.bf16.mxu0 0
        %2158 = vmatpush2.bf16.xpose.msra.mxu0 0
        %2159 = vmatprep.subr.bf16.mxu0 0
        %2160 = vmatpush2.bf16.xpose.msra.mxu0 0
        %2161 = vmatprep.subr.bf16.mxu0 0
        %2162 = vmatpush2.bf16.xpose.msra.mxu0 0
        %2163 = vmatprep.subr.bf16.mxu0 0
        %2164 = vmatpush2.bf16.xpose.msra.mxu0 0
        %2165 = vmatprep.subr.bf16.mxu0 0
        %2166 = vmatpush2.bf16.xpose.msra.mxu0 0
        %2167 = vmatprep.subr.bf16.mxu0 0
        %2168 = vmatpush2.bf16.xpose.msra.mxu0 0
        %2169 = vmatprep.subr.bf16.mxu0 0
        %2170 = vmatpush2.bf16.xpose.msra.mxu0 0
        %2171 = vmatprep.mubr.bf16.mxu0 0
        %2172 = vmatmul.mubr.bf16.gmra.mxu0 %v2113
        %v2173 = vpop.f32.mrf.mxu0
        %v2174 = vadd.f32 0.0, %v2173
        %v2175 = vpop.f32.mrf.mxu0
        %v2176 = vpop.f32.mrf.mxu0
        %v2177 = vpop.f32.mrf.mxu0
        %2178 = vdwg.mxu0
        %v2179 = vpack.c.bf16 %v2040, %v1973
        %v2180 = vpack.c.bf16 %v2174, %v2107
        %v2181 = vld [vmem:[%s5] sm:$0xf]
        %v2182 = vld [vmem:[%s5 + $0x4] sm:$0xf]
        %v2183 = vld [vmem:[%s5 + $0x8] sm:$0xf]
        %v2184 = vld [vmem:[%s5 + $0xc] sm:$0xf]
        %v2185 = vld [vmem:[%s6] sm:$0xff]
        %v2186 = vld [vmem:[%s6 + $0x8] sm:$0xff]
        %v2187 = vld [vmem:[%s6 + $0x10] sm:$0xff]
        %v2188 = vld [vmem:[%s6 + $0x18] sm:$0xff]
        %2190 = vset.pattern.permute.xlu0 0
        %2191 = vperm.xlu0 %2190, %v2185
        %v2192 = vpop.permute.xlu0 %2191
        %2195 = vset.pattern.permute.xlu0 0
        %2196 = vperm.xlu0 %2195, %v2186
        %v2197 = vpop.permute.xlu0 %2196
        %2200 = vset.pattern.permute.xlu0 0
        %2201 = vperm.xlu0 %2200, %v2187
        %v2202 = vpop.permute.xlu0 %2201
        %2205 = vset.pattern.permute.xlu0 0
        %2206 = vperm.xlu0 %2205, %v2188
        %v2207 = vpop.permute.xlu0 %2206
        %v2213 = vunpack.c.l.b16 %v2181
        %v2214 = vunpack.c.l.b16 %v2182
        %v2215 = vunpack.c.l.b16 %v2183
        %v2216 = vunpack.c.l.b16 %v2184
        %v2217 = vpack.c.b16 %v2214, %v2213
        %v2218 = vpack.c.b16 %v2216, %v2215
        %v2220 = vsel %vm440, %v2217, 0
        %v2223 = vsel %vm440, %v2218, 0
        %2225 = vmatprep.subr.bf16.mxu0 0
        %2226 = vmatpush1.bf16.msra.mxu0 0
        %2227 = vmatprep.subr.bf16.mxu0 0
        %2228 = vmatpush1.bf16.msra.mxu0 0
        %2229 = vmatprep.subr.bf16.mxu0 0
        %2230 = vmatpush1.bf16.msra.mxu0 0
        %2231 = vmatprep.subr.bf16.mxu0 0
        %2232 = vmatpush1.bf16.msra.mxu0 0
        %2233 = vmatprep.subr.bf16.mxu0 0
        %2234 = vmatpush1.bf16.msra.mxu0 0
        %2235 = vmatprep.subr.bf16.mxu0 0
        %2236 = vmatpush1.bf16.msra.mxu0 0
        %2237 = vmatprep.subr.bf16.mxu0 0
        %2238 = vmatpush1.bf16.msra.mxu0 %v2180
        %2239 = vmatprep.subr.bf16.mxu0 0
        %2240 = vmatpush1.bf16.msra.mxu0 %v2179
        %2241 = vmatprep.subr.bf16.mxu0 0
        %2242 = vmatpush2.bf16.msra.mxu0 0
        %2243 = vmatprep.subr.bf16.mxu0 0
        %2244 = vmatpush2.bf16.msra.mxu0 0
        %2245 = vmatprep.subr.bf16.mxu0 0
        %2246 = vmatpush2.bf16.msra.mxu0 0
        %2247 = vmatprep.subr.bf16.mxu0 0
        %2248 = vmatpush2.bf16.msra.mxu0 0
        %2249 = vmatprep.subr.bf16.mxu0 0
        %2250 = vmatpush2.bf16.msra.mxu0 0
        %2251 = vmatprep.subr.bf16.mxu0 0
        %2252 = vmatpush2.bf16.msra.mxu0 0
        %2253 = vmatprep.subr.bf16.mxu0 0
        %2254 = vmatpush2.bf16.msra.mxu0 0
        %2255 = vmatprep.subr.bf16.mxu0 0
        %2256 = vmatpush2.bf16.msra.mxu0 0
        %2257 = vmatprep.mubr.bf16.mxu0 0
        %2258 = vmatmul.mubr.bf16.gmra.mxu0 %v2220
        %v2259 = vpop.f32.mrf.mxu0
        %v2260 = vadd.f32 %v2192, %v2259
        %v2261 = vpop.f32.mrf.mxu0
        %v2262 = vpop.f32.mrf.mxu0
        %v2263 = vadd.f32 %v2197, %v2262
        %v2264 = vpop.f32.mrf.mxu0
        %2265 = vmatprep.mubr.bf16.mxu0 0
        %2266 = vmatmul.mubr.bf16.gmra.mxu0 %v2223
        %v2267 = vpop.f32.mrf.mxu0
        %v2268 = vadd.f32 %v2202, %v2267
        %v2269 = vpop.f32.mrf.mxu0
        %v2270 = vpop.f32.mrf.mxu0
        %v2271 = vadd.f32 %v2207, %v2270
        %v2272 = vpop.f32.mrf.mxu0
        %2273 = vdwg.mxu0
        %2274 = vst [vmem:[%s386] sm:$0xff] %v2260
        %2275 = vst [vmem:[%s386 + $0x8] sm:$0xff] %v2263
        %2276 = vst [vmem:[%s386 + $0x10] sm:$0xff] %v2268
        %2277 = vst [vmem:[%s386 + $0x18] sm:$0xff] %v2271
        %s2278 = sand.u32 %s183, 1
        %s2279 = sand.u32 %s183, 1
        %s2280 = smul.addr %s2279, 32
        %s2281 = scalar_lea.vmem [#allocation4], %s2280
        // Predicated region
        $region125: #{efficient_mha.3} parent=115 // pred_check
          %p2282 = pneg %p193
        $region126: #{efficient_mha.3} parent=115 // pred_check_branch
          %2284 = sbr.rel (%p2282) target = $region128
        $region127: #{efficient_mha.3} parent=115 // pred_region
          %s2285 = smul.addr %s18, 8
          %s2286 = scalar_lea.vmem %s7, %s2285
          // Predicated region
          $region129: #{efficient_mha.3} parent=127 // pred_check
            _
          $region130: #{efficient_mha.3} parent=127 // pred_check_branch
            %2288 = sbr.rel (0) target = $region132
          $region131: #{efficient_mha.3} parent=127 // pred_region
            // Predicated region
            $region133: #{efficient_mha.3} parent=131 // pred_check
              _
            $region134: #{efficient_mha.3} parent=131 // pred_check_branch
              %2290 = sbr.rel (0) target = $region136
            $region135: #{efficient_mha.3} parent=131 // pred_region
              // Predicated region
              $region148: #{efficient_mha.3} parent=135 // pred_check
                _
              $region149: #{efficient_mha.3} parent=135 // pred_check_branch
                %2312 = sbr.rel (0) target = $region151
              $region150: #{efficient_mha.3} parent=135 // pred_region
                loop: start=0, step=1, limit=1
                $region152: #{efficient_mha.3} parent=150 // loop_pre_header
                  _
                $region153: #{efficient_mha.3} parent=150 // loop_header
                  %s2314 = sphi 0, %s2318
                  %p2315 = scmp.ge.s32.totalorder %s2314, 1
                  %s2319 = sphi %s2281, %s2281
                  %s2320 = sphi %s2286, %s2286
                $region154: #{efficient_mha.3} parent=150 // loop_header_branch
                  %2317 = sbr.rel (%p2315) target = $region158
                $region155: #{efficient_mha.3} parent=150 // loop_body
                  %v2321 = vld [vmem:[%s2319] sm:$0xff]
                  %2322 = vst [vmem:[%s2320] sm:$0xff] %v2321
                  %v2323 = vld [vmem:[%s2319 + $0x8] sm:$0xff]
                  %2324 = vst [vmem:[%s2320 + $0x10] sm:$0xff] %v2323
                  %v2325 = vld [vmem:[%s2319 + $0x10] sm:$0xff]
                  %2326 = vst [vmem:[%s2320 + $0x20] sm:$0xff] %v2325
                  %v2327 = vld [vmem:[%s2319 + $0x18] sm:$0xff]
                  %2328 = vst [vmem:[%s2320 + $0x30] sm:$0xff] %v2327
                $region156: #{efficient_mha.3} parent=150 // loop_footer
                  %s2318 = sadd.s32 1, %s2314
                $region157: #{efficient_mha.3} parent=150 // loop_footer_branch
                  %2313 = sbr.rel target = $region153
                $region158: #{efficient_mha.3} parent=150 // loop_exit
                  _
              $region151: #{efficient_mha.3} parent=135 // pred_fallthru
                _
              // Predicated region
              $region159: #{efficient_mha.3} parent=135 // pred_check
                _
              $region160: #{efficient_mha.3} parent=135 // pred_check_branch
                %2330 = sbr.rel target = $region162
              $region161: #{efficient_mha.3} parent=135 // pred_region
                _
              $region162: #{efficient_mha.3} parent=135 // pred_fallthru
                _
            $region136: #{efficient_mha.3} parent=131 // pred_fallthru
              _
            // Predicated region
            $region137: #{efficient_mha.3} parent=131 // pred_check
              _
            $region138: #{efficient_mha.3} parent=131 // pred_check_branch
              %2292 = sbr.rel target = $region140
            $region139: #{efficient_mha.3} parent=131 // pred_region
              %s2294 = ssub.s32 256, 1
              loop: start=0, step=1, limit=1
              $region141: #{efficient_mha.3} parent=139 // loop_pre_header
                _
              $region142: #{efficient_mha.3} parent=139 // loop_header
                %s2296 = sphi 0, %s2300
                %p2297 = scmp.ge.s32.totalorder %s2296, 1
                %s2301 = sphi %s2281, %s2281
                %s2302 = sphi %s2286, %s2286
              $region143: #{efficient_mha.3} parent=139 // loop_header_branch
                %2299 = sbr.rel (%p2297) target = $region147
              $region144: #{efficient_mha.3} parent=139 // loop_body
                %v2303 = vld [vmem:[%s2301] sm:%s2294]
                %2304 = vst [vmem:[%s2302] sm:%s2294] %v2303
                %v2305 = vld [vmem:[%s2301 + $0x8] sm:%s2294]
                %2306 = vst [vmem:[%s2302 + $0x10] sm:%s2294] %v2305
                %v2307 = vld [vmem:[%s2301 + $0x10] sm:%s2294]
                %2308 = vst [vmem:[%s2302 + $0x20] sm:%s2294] %v2307
                %v2309 = vld [vmem:[%s2301 + $0x18] sm:%s2294]
                %2310 = vst [vmem:[%s2302 + $0x30] sm:%s2294] %v2309
              $region145: #{efficient_mha.3} parent=139 // loop_footer
                %s2300 = sadd.s32 1, %s2296
              $region146: #{efficient_mha.3} parent=139 // loop_footer_branch
                %2295 = sbr.rel target = $region142
              $region147: #{efficient_mha.3} parent=139 // loop_exit
                _
            $region140: #{efficient_mha.3} parent=131 // pred_fallthru
              _
          $region132: #{efficient_mha.3} parent=127 // pred_fallthru
            _
          %2331 = vnop
        $region128: #{efficient_mha.3} parent=115 // pred_fallthru
          _
      $region116: #{efficient_mha.3} parent=5 // pred_fallthru
        _
      %p2332 = scmp.le.s32.totalorder 2, %s13
      // Predicated region
      $region163: #{efficient_mha.3} parent=5 // pred_check
        %p2333 = pneg %p2332
      $region164: #{efficient_mha.3} parent=5 // pred_check_branch
        %2335 = sbr.rel (%p2333) target = $region166
      $region165: #{efficient_mha.3} parent=5 // pred_region
        %s2336 = ssub.s32 %s13, 2
        // Predicated region
        $region167: #{efficient_mha.3} parent=165 // pred_check
          %p2337 = pneg %p199
        $region168: #{efficient_mha.3} parent=165 // pred_check_branch
          %2339 = sbr.rel (%p2337) target = $region170
        $region169: #{efficient_mha.3} parent=165 // pred_region
          %s2340 = sand.u32 %s184, 1
          %s2341 = sand.u32 %s184, 1
          %s2342 = smul.addr %s2341, 32
          %s2343 = scalar_lea.vmem [#allocation4], %s2342
        $region170: #{efficient_mha.3} parent=165 // pred_fallthru
          _
      $region166: #{efficient_mha.3} parent=5 // pred_fallthru
        _
    $region6: #{efficient_mha.3} parent=1 // loop_footer
      %s17 = sadd.s32 1, %s13
    $region7: #{efficient_mha.3} parent=1 // loop_footer_branch
      %12 = sbr.rel target = $region3
    $region8: #{efficient_mha.3} parent=1 // loop_exit
      _

</llo_original>
